<compile_context>
chip_gen: v7x
topology: tpu7x:2x2x1
jax: 0.10.0
libtpu: 0.0.40
codegen_flags: <defaults>
</compile_context>

<pallas_src>
import functools

import numpy as np
import jax
import jax.numpy as jnp
from jax.experimental import pallas as pl
from jax.experimental.pallas import tpu as pltpu


_RATE = 4
_DILS = (_RATE, 2 * _RATE, 3 * _RATE)            # MSBlock dilations (4, 8, 12)


def _vmem_budget(need_bytes):
    # Explicit scoped-VMEM budget (review item): floor 32 MiB, cap 64 MiB so
    # the same budget is legal on v5e/v6e (128 MiB) and v7x (64 MiB).
    return int(min(max(need_bytes + (8 << 20), 32 << 20), 64 << 20))


# ----------------------------------------------------------------------------
# Pallas kernel: 3x3 (dilated) convolution + bias (+ ReLU), NHWC
# ----------------------------------------------------------------------------
def _conv3x3_kernel(x_ref, w_ref, b_ref, o_ref, xcat_ref, *, dil, H, W, Wp, relu):
    Cin = x_ref.shape[3]
    M = H * Wp

    # Fill the padded, column-pre-shifted input strip once per image; it is
    # reused by every Cout tile (Cout grid axis is "arbitrary", so this step
    # runs before the later tiles of the same image).
    #   xcat[r, c, dx*Cin + ci] == zero-padded-input[r, c + dx*dil, ci]
    @pl.when(pl.program_id(1) == 0)
    def _():
        xin = x_ref[0]
        xcat_ref[...] = jnp.zeros_like(xcat_ref)
        xcat_ref[pl.ds(dil, H), pl.ds(dil, W), pl.ds(0, Cin)] = xin
        xcat_ref[pl.ds(dil, H), pl.ds(0, W), pl.ds(Cin, Cin)] = xin
        if W > dil:
            xcat_ref[pl.ds(dil, H), pl.ds(0, W - dil), pl.ds(2 * Cin, Cin)] = (
                xin[:, dil:, :])

    # 3 dots of K = 3*Cin (one per kernel row); accumulate in registers and
    # write the output tile once (no VMEM accumulator round trips).
    acc = None
    for dy in range(3):
        xs = xcat_ref[pl.ds(dy * dil, H), :, :].reshape(M, 3 * Cin)
        t = jnp.dot(xs, w_ref[dy], preferred_element_type=jnp.float32)
        acc = t if acc is None else acc + t

    y = acc.reshape(H, Wp, o_ref.shape[3])[:, :W, :] + b_ref[0][None, None, :]
    if relu:
        y = jnp.maximum(y, 0.0)
    o_ref[0] = y.astype(o_ref.dtype)


def conv3x3(x, w, b, *, dilation=1, relu=True):
    """'same' 3x3 conv (optionally dilated) + bias + ReLU.

    x: (N, H, W, Cin)  w: (3, 3, Cin, Cout)  b: (Cout,)  -> (N, H, W, Cout) bf16
    """
    N, H, W, Cin = x.shape
    Cout = w.shape[-1]
    if Cout % 256 == 0:
        tc = 256                       # full MXU width on v6e / v7x
    elif Cout % 128 == 0:
        tc = 128
    else:
        tc = Cout
    ct = Cout // tc
    d = int(dilation)
    Hp = H + 2 * d
    Wp = ((W + 2 * d + 15) // 16) * 16          # bf16 sublane (16) aligned
    assert Wp >= W + 2 * d

    w2 = jnp.asarray(w).reshape(3, 3 * Cin, Cout).astype(jnp.bfloat16)
    b2 = jnp.asarray(b).reshape(1, Cout).astype(jnp.float32)

    kernel = functools.partial(_conv3x3_kernel, dil=d, H=H, W=W, Wp=Wp, relu=relu)
    need = (Hp * Wp * 3 * Cin * 2          # shifted input strip
            + 2 * H * W * Cin * 2          # double-buffered input block
            + 2 * 3 * 3 * Cin * tc * 2     # double-buffered weight tile
            + 2 * H * W * tc * 2           # double-buffered output tile
            + H * Wp * tc * 4)             # f32 accumulator spill
    # TODO(synk): for large images add an H-strip grid axis with a manually
    # DMA'd halo (memory_space=pl.ANY + pltpu.make_async_copy) so whole feature
    # maps never live in VMEM at once, and make the strip fill per-core safe so
    # the Cout axis can be megacore-parallel on v7x.
    return pl.pallas_call(
        kernel,
        out_shape=jax.ShapeDtypeStruct((N, H, W, Cout), jnp.bfloat16),
        grid=(N, ct),
        in_specs=[
            pl.BlockSpec((1, H, W, Cin), lambda n, c: (n, 0, 0, 0)),
            pl.BlockSpec((3, 3 * Cin, tc), lambda n, c: (0, 0, c)),
            pl.BlockSpec((1, tc), lambda n, c: (0, c)),
        ],
        out_specs=pl.BlockSpec((1, H, W, tc), lambda n, c: (n, 0, 0, c)),
        scratch_shapes=[pltpu.VMEM((Hp, Wp, 3 * Cin), jnp.bfloat16)],
        compiler_params=pltpu.CompilerParams(
            dimension_semantics=("parallel", "arbitrary"),
            vmem_limit_bytes=_vmem_budget(need)),
    )(x.astype(jnp.bfloat16), w2, b2)


# ----------------------------------------------------------------------------
# Pallas kernel: fused MSBlock tail + folded down/score projection
# ----------------------------------------------------------------------------
def _msblock_tail_kernel(o_ref, w_ref, b_ref, wp_ref, out_ref, xcat_ref, *,
                         dils, H, W, Wp):
    C = o_ref.shape[3]                                   # 32
    M = H * Wp
    xin = o_ref[0]                                       # (H, W, 32) bf16

    # One padded, column-pre-shifted strip per dilated branch.
    xcat_ref[...] = jnp.zeros_like(xcat_ref)
    for br, d in enumerate(dils):
        xcat_ref[br, pl.ds(d, H), pl.ds(d, W), pl.ds(0, C)] = xin
        xcat_ref[br, pl.ds(d, H), pl.ds(0, W), pl.ds(C, C)] = xin
        if W > d:
            xcat_ref[br, pl.ds(d, H), pl.ds(0, W - d), pl.ds(2 * C, C)] = (
                xin[:, d:, :])

    # ms = o + relu(conv_d4(o)) + relu(conv_d8(o)) + relu(conv_d12(o))
    total = xin.astype(jnp.float32)
    for br, d in enumerate(dils):
        acc = None
        for dy in range(3):
            xs = xcat_ref[br, pl.ds(dy * d, H), :, :].reshape(M, 3 * C)
            t = jnp.dot(xs, w_ref[br, dy], preferred_element_type=jnp.float32)
            acc = t if acc is None else acc + t
        y = acc.reshape(H, Wp, C)[:, :W, :] + b_ref[br][None, None, :]
        total = total + jnp.maximum(y, 0.0)

    # Folded (32->21 down conv) @ (21->{score, score_1}) projection: 2 chans.
    p0 = jnp.sum(total * wp_ref[0][None, None, :], axis=-1, keepdims=True)
    p1 = jnp.sum(total * wp_ref[1][None, None, :], axis=-1, keepdims=True)
    out_ref[0] = jnp.concatenate([p0, p1], axis=-1)


def msblock_tail(o, w_dil, b_dil, w_proj):
    """Fused MSBlock tail + per-branch score projection.

    o:      (N, H, W, 32) bf16   -- relu(conv(x)) from the MSBlock
    w_dil:  (3, 3, 96, 32)       -- 3 dilated convs, layout (dy, dx*32+ci, co)
    b_dil:  (3, 32)
    w_proj: (32, 2)              -- down-conv weight @ [score, score_1] weights
    returns (N, H, W, 2) f32     -- ms @ w_proj (stage bias added by caller)
    """
    N, H, W, C = o.shape
    max_d = max(_DILS)
    Hp = H + 2 * max_d
    Wp = ((W + 2 * max_d + 15) // 16) * 16
    kernel = functools.partial(_msblock_tail_kernel, dils=_DILS, H=H, W=W, Wp=Wp)
    need = (3 * Hp * Wp * 3 * C * 2 + 4 * H * W * C * 2
            + 2 * H * Wp * C * 4 + 4 * H * W * 2 * 4)
    return pl.pallas_call(
        kernel,
        out_shape=jax.ShapeDtypeStruct((N, H, W, 2), jnp.float32),
        grid=(N,),
        in_specs=[
            pl.BlockSpec((1, H, W, C), lambda n: (n, 0, 0, 0)),
            pl.BlockSpec((3, 3, 3 * C, C), lambda n: (0, 0, 0, 0)),
            pl.BlockSpec((3, C), lambda n: (0, 0)),
            pl.BlockSpec((2, C), lambda n: (0, 0)),
        ],
        out_specs=pl.BlockSpec((1, H, W, 2), lambda n: (n, 0, 0, 0)),
        scratch_shapes=[pltpu.VMEM((3, Hp, Wp, 3 * C), jnp.bfloat16)],
        compiler_params=pltpu.CompilerParams(
            dimension_semantics=("parallel",),
            vmem_limit_bytes=_vmem_budget(need)),
    )(o.astype(jnp.bfloat16), w_dil.astype(jnp.bfloat16),
      b_dil.astype(jnp.float32), jnp.transpose(w_proj).astype(jnp.float32))


# ----------------------------------------------------------------------------
# XLA glue: ceil-mode max-pool, bilinear ConvTranspose upsample, crop, 1x1s
# ----------------------------------------------------------------------------
def maxpool2x2_ceil(x, stride):
    """2x2 max pool with PyTorch ceil_mode=True semantics (NHWC)."""
    N, H, W, C = x.shape
    if stride == 2:
        Ho, Wo = -(-H // 2), -(-W // 2)
        ph, pw = Ho * 2 - H, Wo * 2 - W
        if ph or pw:
            x = jnp.pad(x, ((0, 0), (0, ph), (0, pw), (0, 0)),
                        constant_values=-jnp.inf)
        return x.reshape(N, Ho, 2, Wo, 2, C).max(axis=(2, 4))
    assert stride == 1
    a = jnp.maximum(x[:, :-1], x[:, 1:])
    return jnp.maximum(a[:, :, :-1], a[:, :, 1:])


def _bilinear_filter(k):
    # matches get_upsampling_weight(1, 1, k) from the reference
    factor = (k + 1) // 2
    center = factor - 1 if k % 2 == 1 else factor - 0.5
    og = np.ogrid[:k, :k]
    filt = (1 - abs(og[0] - center) / factor) * (1 - abs(og[1] - center) / factor)
    return filt.astype(np.float32)


def upsample_bilinear(x, stride, ksize):
    """ConvTranspose2d(1, 1, ksize, stride, bias=False) with bilinear weights."""
    filt = jnp.asarray(_bilinear_filter(ksize)).reshape(ksize, ksize, 1, 1)
    return jax.lax.conv_transpose(
        x, filt, strides=(stride, stride), padding='VALID',
        dimension_numbers=('NHWC', 'HWIO', 'NHWC'))


def crop_like(data, H, W, crop_h, crop_w):
    return data[:, crop_h:crop_h + H, crop_w:crop_w + W, :]


def score1x1(x, w, b):
    # 10->1 fuse conv: 1-lane output glue, done in plain XLA
    return jnp.einsum('nhwc,co->nhwo', x, w) + b


# ----------------------------------------------------------------------------
# BDCN: parameters + forward
# ----------------------------------------------------------------------------
_VGG3 = [('conv1_1', 8, 64, 1), ('conv1_2', 64, 64, 1),
         ('conv2_1', 64, 128, 1), ('conv2_2', 128, 128, 1),
         ('conv3_1', 128, 256, 1), ('conv3_2', 256, 256, 1), ('conv3_3', 256, 256, 1),
         ('conv4_1', 256, 512, 1), ('conv4_2', 512, 512, 1), ('conv4_3', 512, 512, 1),
         ('conv5_1', 512, 512, 2), ('conv5_2', 512, 512, 2), ('conv5_3', 512, 512, 2)]
_MS_CIN = {1: 64, 2: 128, 3: 256, 4: 512, 5: 512}
_MS_N = {1: 2, 2: 2, 3: 3, 4: 3, 5: 3}
_FEAT_START = {1: 0, 2: 2, 3: 4, 4: 7, 5: 10}
_UP = {2: (2, 4), 3: (4, 8), 4: (8, 16), 5: (8, 16)}   # stage -> (stride, ksize)
_CROP = {2: 1, 3: 2, 4: 4, 5: 0}


def init_params(key):
    params = {}

    def conv3_p(k, cin, cout):
        k1, k2 = jax.random.split(k)
        std = float(np.sqrt(2.0 / (9 * cin)))
        w = (std * jax.random.normal(k1, (3, 3, cin, cout), jnp.float32)
             ).astype(jnp.bfloat16)
        b = 0.01 * jax.random.normal(k2, (cout,), jnp.float32)
        return w, b

    def lin_p(k, cin, cout):
        k1, k2 = jax.random.split(k)
        std = float(np.sqrt(2.0 / cin))
        w = std * jax.random.normal(k1, (cin, cout), jnp.float32)
        b = 0.01 * jax.random.normal(k2, (cout,), jnp.float32)
        return w, b

    for name, cin, cout, _ in _VGG3:
        key, sub = jax.random.split(key)
        params[name] = conv3_p(sub, cin, cout)
    for stage in range(1, 6):
        for i in range(1, _MS_N[stage] + 1):
            p = f'ms{stage}_{i}'
            for suffix, cin in (('.conv', _MS_CIN[stage]), ('.conv1', 32),
                                ('.conv2', 32), ('.conv3', 32)):
                key, sub = jax.random.split(key)
                params[p + suffix] = conv3_p(sub, cin, 32)
            key, sub = jax.random.split(key)
            params[f'conv{stage}_{i}_down'] = lin_p(sub, 32, 21)
        for suffix in ('', '_1'):
            key, sub = jax.random.split(key)
            params[f'score_dsn{stage}{suffix}'] = lin_p(sub, 21, 1)
    # fuse: the reference initializes a constant 0.08 weight and zero bias.
    params['fuse'] = (jnp.full((10, 1), 0.08, jnp.float32),
                      jnp.zeros((1,), jnp.float32))
    return params


def bdcn_forward(params, x_nchw):
    x = jnp.transpose(x_nchw, (0, 2, 3, 1)).astype(jnp.float32)      # -> NHWC
    N, H, W, C = x.shape
    if C < 8:   # pad RGB once to 8 channels (MXU-friendly, zeros are inert)
        x = jnp.pad(x, ((0, 0), (0, 0), (0, 0), (0, 8 - C)))
    x = x.astype(jnp.bfloat16)

    # ---- VGG16_C backbone (BDCN variant: pool4 stride 1, dilated conv5_x) ----
    feats = []
    h = x
    for name, _, _, dil in _VGG3:
        h = conv3x3(h, *params[name], dilation=dil)
        feats.append(h)
        if name in ('conv1_2', 'conv2_2', 'conv3_3'):
            h = maxpool2x2_ceil(h, 2)
        elif name == 'conv4_3':
            h = maxpool2x2_ceil(h, 1)

    # ---- side branches: conv -> fused MSBlock tail -> folded down/score ----
    s, s_1 = {}, {}
    for stage in range(1, 6):
        n_br = _MS_N[stage]
        ws, bs = params[f'score_dsn{stage}']             # (21, 1), (1,)
        ws1, bs1 = params[f'score_dsn{stage}_1']
        wsc = jnp.concatenate([ws, ws1], axis=1)         # (21, 2)
        bsc = jnp.concatenate([bs, bs1], axis=0)         # (2,)
        acc2 = None
        bias_sum = jnp.zeros((21,), jnp.float32)
        for i in range(1, n_br + 1):
            pre = f'ms{stage}_{i}'
            feat = feats[_FEAT_START[stage] + i - 1]
            o = conv3x3(feat, *params[pre + '.conv'], dilation=1)
            w_stack = jnp.stack([params[pre + '.conv1'][0].reshape(3, 96, 32),
                                 params[pre + '.conv2'][0].reshape(3, 96, 32),
                                 params[pre + '.conv3'][0].reshape(3, 96, 32)])
            b_stack = jnp.stack([params[pre + '.conv1'][1],
                                 params[pre + '.conv2'][1],
                                 params[pre + '.conv3'][1]])
            wd, bd = params[f'conv{stage}_{i}_down']     # (32, 21), (21,)
            w_proj = wd.astype(jnp.float32) @ wsc        # (32, 2)
            part = msblock_tail(o, w_stack, b_stack, w_proj)
            acc2 = part if acc2 is None else acc2 + part
            bias_sum = bias_sum + bd
        acc2 = acc2 + (bias_sum @ wsc + bsc)[None, None, None, :]
        sc, sc1 = acc2[..., 0:1], acc2[..., 1:2]
        if stage in _UP:
            stride, k = _UP[stage]
            off = _CROP[stage]
            sc = crop_like(upsample_bilinear(sc, stride, k), H, W, off, off)
            sc1 = crop_like(upsample_bilinear(sc1, stride, k), H, W, off, off)
        s[stage], s_1[stage] = sc, sc1

    # ---- bidirectional cascade (detach only affects gradients) ----
    p1_1 = s[1]
    p2_1 = s[2] + s[1]
    p3_1 = s[3] + s[2] + s[1]
    p4_1 = s[4] + s[3] + s[2] + s[1]
    p5_1 = s[5] + s[4] + s[3] + s[2] + s[1]
    p1_2 = s_1[1] + s_1[2] + s_1[3] + s_1[4] + s_1[5]
    p2_2 = s_1[2] + s_1[3] + s_1[4] + s_1[5]
    p3_2 = s_1[3] + s_1[4] + s_1[5]
    p4_2 = s_1[4] + s_1[5]
    p5_2 = s_1[5]

    cat = jnp.concatenate([p1_1, p2_1, p3_1, p4_1, p5_1,
                           p1_2, p2_2, p3_2, p4_2, p5_2], axis=-1)
    wf, bf = params['fuse']
    fuse = score1x1(cat, wf, bf)

    outs = (p1_1, p2_1, p3_1, p4_1, p5_1, p1_2, p2_2, p3_2, p4_2, p5_2, fuse)
    return tuple(jnp.transpose(t, (0, 3, 1, 2)) for t in outs)       # -> NCHW


# ----------------------------------------------------------------------------
# XLA reference conv (used only for in-script unit checks)
# ----------------------------------------------------------------------------
def _ref_conv3x3(x, w, b, dilation, relu=True):
    y = jax.lax.conv_general_dilated(
        x.astype(jnp.float32), w.astype(jnp.float32), (1, 1),
        ((dilation, dilation), (dilation, dilation)),
        rhs_dilation=(dilation, dilation),
        dimension_numbers=('NHWC', 'HWIO', 'NHWC'),
        precision=jax.lax.Precision.HIGHEST)
    y = y + b.astype(jnp.float32)[None, None, None, :]
    return jnp.maximum(y, 0.0) if relu else y


if __name__ == "__main__":
    root = jax.random.PRNGKey(0)
    kx, kw, kb, ko, kt = jax.random.split(root, 5)

    # ---- unit check: generic conv3x3 kernel vs XLA reference ----------------
    xt = jax.random.normal(kx, (2, 12, 13, 16), jnp.float32).astype(jnp.bfloat16)
    wt = (np.sqrt(2.0 / (9 * 16)) *
          jax.random.normal(kw, (3, 3, 16, 32), jnp.float32)).astype(jnp.bfloat16)
    bt = 0.1 * jax.random.normal(kb, (32,), jnp.float32)
    for dil in (1, 2):
        got = np.asarray(conv3x3(xt, wt, bt, dilation=dil), dtype=np.float32)
        want = np.asarray(_ref_conv3x3(xt, wt, bt, dil))
        np.testing.assert_allclose(got, want, atol=0.1, rtol=0.1)

    # ---- unit check: fused MSBlock tail kernel vs XLA reference -------------
    ot = jax.random.normal(ko, (2, 10, 9, 32), jnp.float32).astype(jnp.bfloat16)
    ks = jax.random.split(kt, 7)
    std = np.sqrt(2.0 / (9 * 32))
    wds = [(std * jax.random.normal(ks[j], (3, 3, 32, 32), jnp.float32)
            ).astype(jnp.bfloat16) for j in range(3)]
    bds = [0.1 * jax.random.normal(ks[3 + j], (32,), jnp.float32) for j in range(3)]
    wp = jax.random.normal(ks[6], (32, 2), jnp.float32) / np.sqrt(32.0)
    got = np.asarray(msblock_tail(
        ot, jnp.stack([w.reshape(3, 96, 32) for w in wds]), jnp.stack(bds), wp))
    tot = ot.astype(jnp.float32)
    for w, b, d in zip(wds, bds, _DILS):
        tot = tot + _ref_conv3x3(ot, w, b, d)
    want = np.asarray(jnp.einsum('nhwc,cd->nhwd', tot, wp))
    np.testing.assert_allclose(got, want, atol=0.05, rtol=0.05)

    # ---- full BDCN forward ---------------------------------------------------
    params = init_params(jax.random.PRNGKey(0))
    x = jax.random.normal(jax.random.PRNGKey(1), (2, 3, 32, 32), jnp.float32)
    fwd = jax.jit(bdcn_forward)
    outs = jax.block_until_ready(fwd(params, x))

    assert len(outs) == 11
    for o in outs:
        assert o.shape == (2, 1, 32, 32)
        assert bool(jnp.all(jnp.isfinite(o)))
    print("KERNEL_OK")
</pallas_src>

<mosaic_0001>
module attributes {stable_mosaic.version = 11 : i64} {
  func.func @_conv3x3_kernel(%arg0: i32, %arg1: i32, %arg2: memref<1x12x13x16xbf16, #tpu.memory_space<vmem>>, %arg3: memref<3x48x32xbf16, #tpu.memory_space<vmem>>, %arg4: memref<1x32xf32, #tpu.memory_space<vmem>>, %arg5: memref<1x12x13x32xbf16, #tpu.memory_space<vmem>>, %arg6: memref<14x16x48xbf16, #tpu.memory_space<vmem>>) attributes {dimension_semantics = [#tpu.dimension_semantics<parallel>, #tpu.dimension_semantics<arbitrary>], iteration_bounds = array<i64: 2, 1>, scalar_prefetch = 0 : i64, scratch_operands = 1 : i64, tpu.core_type = #tpu.core_type<tc>, window_params = [{transform_indices = @transform_0, window_bounds = array<i64: 1, 12, 13, 16>}, {transform_indices = @transform_1, window_bounds = array<i64: 3, 48, 32>}, {transform_indices = @transform_2, window_bounds = array<i64: 1, 32>}, {transform_indices = @transform_3, window_bounds = array<i64: 1, 12, 13, 32>}]} {
    %c0_i32 = arith.constant 0 : i32
    %0 = arith.cmpi eq, %arg1, %c0_i32 : i32
    %1 = arith.extui %0 : i1 to i32
    %c0_i32_0 = arith.constant 0 : i32
    %2 = arith.cmpi ne, %1, %c0_i32_0 : i32
    scf.if %2 {
      %c0_25 = arith.constant 0 : index
      %c0_26 = arith.constant 0 : index
      %c0_27 = arith.constant 0 : index
      %c0_28 = arith.constant 0 : index
      %33 = vector.load %arg2[%c0_25, %c0_26, %c0_27, %c0_28] : memref<1x12x13x16xbf16, #tpu.memory_space<vmem>>, vector<1x12x13x16xbf16>
      %34 = vector.shape_cast %33 : vector<1x12x13x16xbf16> to vector<12x13x16xbf16>
      %cst_29 = arith.constant 0.000000e+00 : bf16
      %35 = vector.broadcast %cst_29 : bf16 to vector<14x16x48xbf16>
      %c0_30 = arith.constant 0 : index
      %c0_31 = arith.constant 0 : index
      %c0_32 = arith.constant 0 : index
      %36 = vector.load %arg6[%c0_30, %c0_31, %c0_32] : memref<14x16x48xbf16, #tpu.memory_space<vmem>>, vector<14x16x48xbf16>
      tpu.vector_store %arg6[%c0_30, %c0_31, %c0_32], %35 {strides = array<i32>} : memref<14x16x48xbf16, #tpu.memory_space<vmem>>, vector<14x16x48xbf16>,
      %c1_33 = arith.constant 1 : index
      %c1_34 = arith.constant 1 : index
      %c0_35 = arith.constant 0 : index
      %37 = vector.load %arg6[%c1_33, %c1_34, %c0_35] : memref<14x16x48xbf16, #tpu.memory_space<vmem>>, vector<12x13x16xbf16>
      tpu.vector_store %arg6[%c1_33, %c1_34, %c0_35], %34 {strides = array<i32>} : memref<14x16x48xbf16, #tpu.memory_space<vmem>>, vector<12x13x16xbf16>,
      %c1_36 = arith.constant 1 : index
      %c0_37 = arith.constant 0 : index
      %c16 = arith.constant 16 : index
      %38 = vector.load %arg6[%c1_36, %c0_37, %c16] : memref<14x16x48xbf16, #tpu.memory_space<vmem>>, vector<12x13x16xbf16>
      tpu.vector_store %arg6[%c1_36, %c0_37, %c16], %34 {strides = array<i32>} : memref<14x16x48xbf16, #tpu.memory_space<vmem>>, vector<12x13x16xbf16>,
      %39 = vector.extract_strided_slice %34 {offsets = [0, 1, 0], sizes = [12, 12, 16], strides = [1, 1, 1]} : vector<12x13x16xbf16> to vector<12x12x16xbf16>
      %c1_38 = arith.constant 1 : index
      %c0_39 = arith.constant 0 : index
      %c32 = arith.constant 32 : index
      %40 = vector.load %arg6[%c1_38, %c0_39, %c32] : memref<14x16x48xbf16, #tpu.memory_space<vmem>>, vector<12x12x16xbf16>
      tpu.vector_store %arg6[%c1_38, %c0_39, %c32], %39 {strides = array<i32>} : memref<14x16x48xbf16, #tpu.memory_space<vmem>>, vector<12x12x16xbf16>,
    } else {
    }
    %c0 = arith.constant 0 : index
    %c0_1 = arith.constant 0 : index
    %c0_2 = arith.constant 0 : index
    %3 = vector.load %arg6[%c0, %c0_1, %c0_2] : memref<14x16x48xbf16, #tpu.memory_space<vmem>>, vector<12x16x48xbf16>
    %4 = vector.shape_cast %3 : vector<12x16x48xbf16> to vector<192x48xbf16>
    %c0_3 = arith.constant 0 : index
    %c0_4 = arith.constant 0 : index
    %c0_5 = arith.constant 0 : index
    %5 = vector.load %arg3[%c0_3, %c0_4, %c0_5] : memref<3x48x32xbf16, #tpu.memory_space<vmem>>, vector<1x48x32xbf16>
    %6 = vector.shape_cast %5 : vector<1x48x32xbf16> to vector<48x32xbf16>
    %cst = arith.constant dense<0.000000e+00> : vector<192x32xf32>
    %7 = tpu.matmul %4, %6, %cst {dimension_numbers = #tpu.dot_dimension_numbers<[1], [0], [0], [1], [0, 0, 1, 1], [], []>} : vector<192x48xbf16>, vector<48x32xbf16>, vector<192x32xf32> -> vector<192x32xf32>
    %c1 = arith.constant 1 : index
    %c0_6 = arith.constant 0 : index
    %c0_7 = arith.constant 0 : index
    %8 = vector.load %arg6[%c1, %c0_6, %c0_7] : memref<14x16x48xbf16, #tpu.memory_space<vmem>>, vector<12x16x48xbf16>
    %9 = vector.shape_cast %8 : vector<12x16x48xbf16> to vector<192x48xbf16>
    %c1_8 = arith.constant 1 : index
    %c0_9 = arith.constant 0 : index
    %c0_10 = arith.constant 0 : index
    %10 = vector.load %arg3[%c1_8, %c0_9, %c0_10] : memref<3x48x32xbf16, #tpu.memory_space<vmem>>, vector<1x48x32xbf16>
    %11 = vector.shape_cast %10 : vector<1x48x32xbf16> to vector<48x32xbf16>
    %cst_11 = arith.constant dense<0.000000e+00> : vector<192x32xf32>
    %12 = tpu.matmul %9, %11, %cst_11 {dimension_numbers = #tpu.dot_dimension_numbers<[1], [0], [0], [1], [0, 0, 1, 1], [], []>} : vector<192x48xbf16>, vector<48x32xbf16>, vector<192x32xf32> -> vector<192x32xf32>
    %13 = arith.addf %7, %12 : vector<192x32xf32>
    %c2 = arith.constant 2 : index
    %c0_12 = arith.constant 0 : index
    %c0_13 = arith.constant 0 : index
    %14 = vector.load %arg6[%c2, %c0_12, %c0_13] : memref<14x16x48xbf16, #tpu.memory_space<vmem>>, vector<12x16x48xbf16>
    %15 = vector.shape_cast %14 : vector<12x16x48xbf16> to vector<192x48xbf16>
    %c2_14 = arith.constant 2 : index
    %c0_15 = arith.constant 0 : index
    %c0_16 = arith.constant 0 : index
    %16 = vector.load %arg3[%c2_14, %c0_15, %c0_16] : memref<3x48x32xbf16, #tpu.memory_space<vmem>>, vector<1x48x32xbf16>
    %17 = vector.shape_cast %16 : vector<1x48x32xbf16> to vector<48x32xbf16>
    %cst_17 = arith.constant dense<0.000000e+00> : vector<192x32xf32>
    %18 = tpu.matmul %15, %17, %cst_17 {dimension_numbers = #tpu.dot_dimension_numbers<[1], [0], [0], [1], [0, 0, 1, 1], [], []>} : vector<192x48xbf16>, vector<48x32xbf16>, vector<192x32xf32> -> vector<192x32xf32>
    %19 = arith.addf %13, %18 : vector<192x32xf32>
    %20 = vector.shape_cast %19 : vector<192x32xf32> to vector<12x16x32xf32>
    %21 = vector.extract_strided_slice %20 {offsets = [0, 0, 0], sizes = [12, 13, 32], strides = [1, 1, 1]} : vector<12x16x32xf32> to vector<12x13x32xf32>
    %c0_18 = arith.constant 0 : index
    %c0_19 = arith.constant 0 : index
    %22 = vector.load %arg4[%c0_18, %c0_19] : memref<1x32xf32, #tpu.memory_space<vmem>>, vector<1x32xf32>
    %23 = vector.shape_cast %22 : vector<1x32xf32> to vector<32xf32>
    %24 = vector.shape_cast %23 : vector<32xf32> to vector<1x1x32xf32>
    %25 = vector.broadcast %24 : vector<1x1x32xf32> to vector<12x13x32xf32>
    %26 = arith.addf %21, %25 : vector<12x13x32xf32>
    %cst_20 = arith.constant 0.000000e+00 : f32
    %27 = vector.broadcast %cst_20 : f32 to vector<12x13x32xf32>
    %28 = arith.maximumf %26, %27 : vector<12x13x32xf32>
    %29 = arith.truncf %28 : vector<12x13x32xf32> to vector<12x13x32xbf16>
    %c0_21 = arith.constant 0 : index
    %c0_22 = arith.constant 0 : index
    %c0_23 = arith.constant 0 : index
    %c0_24 = arith.constant 0 : index
    %30 = vector.load %arg5[%c0_21, %c0_22, %c0_23, %c0_24] : memref<1x12x13x32xbf16, #tpu.memory_space<vmem>>, vector<1x12x13x32xbf16>
    %31 = vector.shape_cast %30 : vector<1x12x13x32xbf16> to vector<12x13x32xbf16>
    %32 = vector.shape_cast %29 : vector<12x13x32xbf16> to vector<1x12x13x32xbf16>
    tpu.vector_store %arg5[%c0_21, %c0_22, %c0_23, %c0_24], %32 {strides = array<i32>} : memref<1x12x13x32xbf16, #tpu.memory_space<vmem>>, vector<1x12x13x32xbf16>,
    return
  }
  func.func @transform_0(%arg0: i32, %arg1: i32) -> (i32, i32, i32, i32) {
    %c0_i32 = arith.constant 0 : i32
    %c0_i32_0 = arith.constant 0 : i32
    %c0_i32_1 = arith.constant 0 : i32
    %c0_i32_2 = arith.constant 0 : i32
    return %arg0, %c0_i32, %c0_i32_0, %c0_i32_1 : i32, i32, i32, i32
  }
  func.func @transform_1(%arg0: i32, %arg1: i32) -> (i32, i32, i32) {
    %c0_i32 = arith.constant 0 : i32
    %c0_i32_0 = arith.constant 0 : i32
    %c0_i32_1 = arith.constant 0 : i32
    return %c0_i32, %c0_i32_0, %arg1 : i32, i32, i32
  }
  func.func @transform_2(%arg0: i32, %arg1: i32) -> (i32, i32) {
    %c0_i32 = arith.constant 0 : i32
    %c0_i32_0 = arith.constant 0 : i32
    return %c0_i32, %arg1 : i32, i32
  }
  func.func @transform_3(%arg0: i32, %arg1: i32) -> (i32, i32, i32, i32) {
    %c0_i32 = arith.constant 0 : i32
    %c0_i32_0 = arith.constant 0 : i32
    %c0_i32_1 = arith.constant 0 : i32
    return %arg0, %c0_i32, %c0_i32_0, %arg1 : i32, i32, i32, i32
  }
}

</mosaic_0001>

<llo_original>
// kernel: tpu_custom_call.1
$region0: #{tpu_custom_call.1}
  #allocation0 [shape = 'u32[]', space=smem, size = 0x4, offset = 0x4, fixed_abs, tag = 'smem constant byte address 0x4 - core index']
  #allocation1 [shape = 'u32[144,128]{1,0:T(1,128)}', space=vmem, size = 0x12000, scoped, tag = 'internal scratch']
  #allocation2 [shape = 'bf16[14,16,48]{2,1,0:T(16,128)(2,1)}', space=vmem, size = 0xe000, scoped, tag = 'scratch operand']
  %s0 = inlined_call_operand.vmem [shape: bf16[2,12,13,16], index: 0, kind: input, shape index: {}]
  %s1 = inlined_call_operand.vmem [shape: bf16[3,48,32], index: 1, kind: input, shape index: {}]
  %s2 = inlined_call_operand.vmem [shape: f32[1,32], index: 2, kind: input, shape index: {}]
  %s3 = inlined_call_operand.vmem [shape: bf16[2,12,13,32], index: 3, kind: output, shape index: {}]
  %s4 = sld [smem:[#allocation0]]
  $region49: #{tpu_custom_call.1} parent=0
    _
  %s6 = ssub.s32 1, %s4
  %s7 = scalar_select 0, %s6, %s4
  loop: start=0, step=1, limit=4
  $region2: #{tpu_custom_call.1} parent=0 // loop_pre_header
    _
  $region3: #{tpu_custom_call.1} parent=0 // loop_header
    %s9 = sphi 0, %s13
    %p10 = scmp.ge.s32.totalorder %s9, 4
    %s16 = sphi 0, %s28
    %s17 = sphi 0, %s24
    %s18 = sphi 0, %s16
    %s19 = sphi 0, %s17
    %s20 = sphi 0, %s18
    %s21 = sphi 0, %s19
    %s31 = sphi 0, %s33
    %s34 = sphi 0, %s31
    %s35 = sphi 0, %s34
    %s51 = sphi 0, %s35
    %s57 = sphi 0, %s59
    %s60 = sphi 0, %s57
    %s61 = sphi 0, %s60
    %s77 = sphi 0, %s61
    %s83 = sphi 0, %s85
    %s86 = sphi 0, %s83
    %s87 = sphi 0, %s86
    %s103 = sphi 0, %s87
    %s111 = sphi 0, %s113
    %s114 = sphi 0, %s111
    %s115 = sphi 0, %s114
    %s131 = sphi 0, %s115
  $region4: #{tpu_custom_call.1} parent=0 // loop_header_branch
    %12 = sbr.rel (%p10) target = $region8
  $region5: #{tpu_custom_call.1} parent=0 // loop_body
    %s14 = ssub.s32 %s9, 1
    %s15 = ssub.s32 %s9, 2
    %s22 = sadd.s32 1, %s17
    %p23 = scmp.ge.s32.totalorder %s22, 1
    %s24 = scalar_select %p23, 0, %s22
    %s25 = sadd.s32 1, %s16
    %s26 = scalar_select %p23, %s25, %s16
    %p27 = scmp.ge.s32.totalorder %s26, 2
    %s28 = scalar_select %p27, 0, %s26
    %s29 = ssub.s32 %s16, %s28
    %p30 = scmp.eq.s32.totalorder %s29, 0
    %s32 = sadd.s32 %s31, 1
    %s33 = scalar_select %p30, %s31, %s32
    %p36 = pneg %p30
    %p37 = scmp.eq.s32.totalorder %s9, 1
    %p38 = por %p36, %p37
    %p39 = scmp.ne.s32.totalorder %s31, %s34
    %p40 = scmp.eq.s32.totalorder %s9, 0
    %p41 = por %p39, %p40
    %p42 = scmp.ne.s32.totalorder %s31, %s34
    %p43 = scmp.eq.s32.totalorder %s14, 1
    %p44 = por %p42, %p43
    %p45 = scmp.ne.s32.totalorder %s34, %s35
    %p46 = scmp.eq.s32.totalorder %s14, 0
    %p47 = por %p45, %p46
    %p48 = scmp.ne.s32.totalorder %s34, %s35
    %p49 = scmp.eq.s32.totalorder %s15, 1
    %p50 = por %p48, %p49
    %p52 = scmp.ne.s32.totalorder %s35, %s51
    %p53 = scmp.eq.s32.totalorder %s15, 0
    %p54 = por %p52, %p53
    %s55 = ssub.s32 %s17, %s24
    %p56 = scmp.eq.s32.totalorder %s55, 0
    %s58 = sadd.s32 %s57, 1
    %s59 = scalar_select %p56, %s57, %s58
    %p62 = pneg %p56
    %p63 = scmp.eq.s32.totalorder %s9, 1
    %p64 = por %p62, %p63
    %p65 = scmp.ne.s32.totalorder %s57, %s60
    %p66 = scmp.eq.s32.totalorder %s9, 0
    %p67 = por %p65, %p66
    %p68 = scmp.ne.s32.totalorder %s57, %s60
    %p69 = scmp.eq.s32.totalorder %s14, 1
    %p70 = por %p68, %p69
    %p71 = scmp.ne.s32.totalorder %s60, %s61
    %p72 = scmp.eq.s32.totalorder %s14, 0
    %p73 = por %p71, %p72
    %p74 = scmp.ne.s32.totalorder %s60, %s61
    %p75 = scmp.eq.s32.totalorder %s15, 1
    %p76 = por %p74, %p75
    %p78 = scmp.ne.s32.totalorder %s61, %s77
    %p79 = scmp.eq.s32.totalorder %s15, 0
    %p80 = por %p78, %p79
    %s81 = ssub.s32 %s17, %s24
    %p82 = scmp.eq.s32.totalorder %s81, 0
    %s84 = sadd.s32 %s83, 1
    %s85 = scalar_select %p82, %s83, %s84
    %p88 = pneg %p82
    %p89 = scmp.eq.s32.totalorder %s9, 1
    %p90 = por %p88, %p89
    %p91 = scmp.ne.s32.totalorder %s83, %s86
    %p92 = scmp.eq.s32.totalorder %s9, 0
    %p93 = por %p91, %p92
    %p94 = scmp.ne.s32.totalorder %s83, %s86
    %p95 = scmp.eq.s32.totalorder %s14, 1
    %p96 = por %p94, %p95
    %p97 = scmp.ne.s32.totalorder %s86, %s87
    %p98 = scmp.eq.s32.totalorder %s14, 0
    %p99 = por %p97, %p98
    %p100 = scmp.ne.s32.totalorder %s86, %s87
    %p101 = scmp.eq.s32.totalorder %s15, 1
    %p102 = por %p100, %p101
    %p104 = scmp.ne.s32.totalorder %s87, %s103
    %p105 = scmp.eq.s32.totalorder %s15, 0
    %p106 = por %p104, %p105
    %s107 = ssub.s32 %s16, %s28
    %s108 = ssub.s32 %s17, %s24
    %s109 = sor.u32 %s107, %s108
    %p110 = scmp.eq.s32.totalorder %s109, 0
    %s112 = sadd.s32 %s111, 1
    %s113 = scalar_select %p110, %s111, %s112
    %p116 = pneg %p110
    %p117 = scmp.eq.s32.totalorder %s9, 1
    %p118 = por %p116, %p117
    %p119 = scmp.ne.s32.totalorder %s111, %s114
    %p120 = scmp.eq.s32.totalorder %s9, 0
    %p121 = por %p119, %p120
    %p122 = scmp.ne.s32.totalorder %s111, %s114
    %p123 = scmp.eq.s32.totalorder %s14, 1
    %p124 = por %p122, %p123
    %p125 = scmp.ne.s32.totalorder %s114, %s115
    %p126 = scmp.eq.s32.totalorder %s14, 0
    %p127 = por %p125, %p126
    %p128 = scmp.ne.s32.totalorder %s114, %s115
    %p129 = scmp.eq.s32.totalorder %s15, 1
    %p130 = por %p128, %p129
    %p132 = scmp.ne.s32.totalorder %s115, %s131
    %p133 = scmp.eq.s32.totalorder %s15, 0
    %p134 = por %p132, %p133
    %p135 = scmp.le.s32.totalorder 1, %s9
    %p136 = scmp.lt.s32.totalorder %s9, 3
    %p137 = pnand %p135, %p136
    %p138 = pneg %p137
    // Predicated region
    $region9: #{tpu_custom_call.1} parent=5 // pred_check
      _
    $region10: #{tpu_custom_call.1} parent=5 // pred_check_branch
      %140 = sbr.rel (%p137) target = $region12
    $region11: #{tpu_custom_call.1} parent=5 // pred_region
      %s141 = ssub.s32 %s9, 1
      // Predicated region
      $region13: #{tpu_custom_call.1} parent=11 // pred_check
        %p142 = pneg %p73
      $region14: #{tpu_custom_call.1} parent=11 // pred_check_branch
        %144 = sbr.rel (%p142) target = $region16
      $region15: #{tpu_custom_call.1} parent=11 // pred_region
        %p145 = scmp.lt.s32.totalorder %s19, 0
        %s146 = scalar_select %p145, %s19, 0
        %s147 = smul.addr %s146, 4
        %s148 = scalar_lea.vmem %s1, %s147
      $region16: #{tpu_custom_call.1} parent=11 // pred_fallthru
        _
      // Predicated region
      $region17: #{tpu_custom_call.1} parent=11 // pred_check
        %p149 = pneg %p99
      $region18: #{tpu_custom_call.1} parent=11 // pred_check_branch
        %151 = sbr.rel (%p149) target = $region20
      $region19: #{tpu_custom_call.1} parent=11 // pred_region
        %p152 = scmp.lt.s32.totalorder %s19, 0
        %s153 = scalar_select %p152, %s19, 0
        %s154 = scalar_lea.vmem %s2, %s153
      $region20: #{tpu_custom_call.1} parent=11 // pred_fallthru
        _
    $region12: #{tpu_custom_call.1} parent=5 // pred_fallthru
      _
    %p155 = scmp.lt.s32.totalorder %s9, 2
    // Predicated region
    $region21: #{tpu_custom_call.1} parent=5 // pred_check
      %p156 = pneg %p155
    $region22: #{tpu_custom_call.1} parent=5 // pred_check_branch
      %158 = sbr.rel (%p156) target = $region24
    $region23: #{tpu_custom_call.1} parent=5 // pred_region
      // Predicated region
      $region25: #{tpu_custom_call.1} parent=23 // pred_check
        %p159 = pneg %p41
      $region26: #{tpu_custom_call.1} parent=23 // pred_check_branch
        %161 = sbr.rel (%p159) target = $region28
      $region27: #{tpu_custom_call.1} parent=23 // pred_region
        %p162 = scmp.lt.s32.totalorder %s16, 1
        %s163 = scalar_select %p162, %s16, 1
        %s164 = smul.addr %s163, 24
        %s165 = smul.addr %s164, 4
        %s166 = scalar_lea.vmem %s0, %s165
      $region28: #{tpu_custom_call.1} parent=23 // pred_fallthru
        _
    $region24: #{tpu_custom_call.1} parent=5 // pred_fallthru
      _
    %p167 = scmp.le.s32.totalorder 1, %s9
    %p168 = scmp.lt.s32.totalorder %s9, 3
    %p169 = pnand %p167, %p168
    %p170 = pneg %p169
    // Predicated region
    $region29: #{tpu_custom_call.1} parent=5 // pred_check
      _
    $region30: #{tpu_custom_call.1} parent=5 // pred_check_branch
      %172 = sbr.rel (%p169) target = $region32
    $region31: #{tpu_custom_call.1} parent=5 // pred_region
      %s173 = ssub.s32 %s9, 1
      %p174 = scmp.lt.s32.totalorder %s18, 1
      %s175 = scalar_select %p174, %s18, 1
      %s176 = smul.addr %s175, 24
      %s177 = smul.addr %s176, 4
      %s178 = scalar_lea.vmem %s0, %s177
      %p179 = pneg %p47
      %p180 = pneg %p44
      %p181 = scmp.lt.s32.totalorder %s19, 0
      %s182 = scalar_select %p181, %s19, 0
      %s183 = smul.addr %s182, 4
      %s184 = scalar_lea.vmem %s1, %s183
      %p185 = pneg %p73
      %p186 = pneg %p70
      %p187 = scmp.lt.s32.totalorder %s19, 0
      %s188 = scalar_select %p187, %s19, 0
      %s189 = scalar_lea.vmem %s2, %s188
      %p190 = pneg %p99
      %p191 = pneg %p96
      %p192 = pneg %p127
      %p193 = pneg %p124
      %p194 = scmp.lt.s32.totalorder %s18, 1
      %s195 = scalar_select %p194, %s18, 1
      %p196 = scmp.lt.s32.totalorder %s19, 0
      %s197 = scalar_select %p196, %s19, 0
      %s198 = smul.addr %s195, 24
      %s199 = sadd.s32 %s197, %s198
      %s200 = smul.addr %s199, 4
      %s201 = scalar_lea.vmem %s3, %s200
      %p202 = scmp.lt.s32.totalorder %s18, 1
      %s203 = scalar_select %p202, %s18, 1
      %s204 = smul.addr %s203, 24
      %s205 = smul.addr %s204, 4
      %s206 = scalar_lea.vmem %s0, %s205
      %p207 = scmp.lt.s32.totalorder %s19, 0
      %s208 = scalar_select %p207, %s19, 0
      %s209 = smul.addr %s208, 4
      %s210 = scalar_lea.vmem %s1, %s209
      %p211 = scmp.lt.s32.totalorder %s19, 0
      %s212 = scalar_select %p211, %s19, 0
      %s213 = scalar_lea.vmem %s2, %s212
      %p214 = scmp.lt.s32.totalorder %s18, 1
      %s215 = scalar_select %p214, %s18, 1
      %p216 = scmp.lt.s32.totalorder %s19, 0
      %s217 = scalar_select %p216, %s19, 0
      %s218 = smul.addr %s215, 24
      %s219 = sadd.s32 %s217, %s218
      %s220 = smul.addr %s219, 4
      %s221 = scalar_lea.vmem %s3, %s220
      %p223 = scmp.eq.s32.totalorder %s19, 0
      // Predicated region
      $region33: #{tpu_custom_call.1} parent=31 // pred_check
        %p224 = pneg %p223
      $region34: #{tpu_custom_call.1} parent=31 // pred_check_branch
        %226 = sbr.rel (%p224) target = $region36
      $region35: #{tpu_custom_call.1} parent=31 // pred_region
        %v227 = vld [vmem:[%s206] sm:$0xf]
        %v228 = vld [vmem:[%s206 + $0x4] sm:$0x7]
        %v229 = vld [vmem:[%s206 + $0x8] sm:$0xf]
        %v230 = vld [vmem:[%s206 + $0xc] sm:$0x7]
        %v231 = vld [vmem:[%s206 + $0x10] sm:$0xf]
        %v232 = vld [vmem:[%s206 + $0x14] sm:$0x7]
        %v233 = vld [vmem:[%s206 + $0x18] sm:$0xf]
        %v234 = vld [vmem:[%s206 + $0x1c] sm:$0x7]
        %v235 = vld [vmem:[%s206 + $0x20] sm:$0xf]
        %v236 = vld [vmem:[%s206 + $0x24] sm:$0x7]
        %v237 = vld [vmem:[%s206 + $0x28] sm:$0xf]
        %v238 = vld [vmem:[%s206 + $0x2c] sm:$0x7]
        %v239 = vld [vmem:[%s206 + $0x30] sm:$0xf]
        %v240 = vld [vmem:[%s206 + $0x34] sm:$0x7]
        %v241 = vld [vmem:[%s206 + $0x38] sm:$0xf]
        %v242 = vld [vmem:[%s206 + $0x3c] sm:$0x7]
        %v243 = vld [vmem:[%s206 + $0x40] sm:$0xf]
        %v244 = vld [vmem:[%s206 + $0x44] sm:$0x7]
        %v245 = vld [vmem:[%s206 + $0x48] sm:$0xf]
        %v246 = vld [vmem:[%s206 + $0x4c] sm:$0x7]
        %v247 = vld [vmem:[%s206 + $0x50] sm:$0xf]
        %v248 = vld [vmem:[%s206 + $0x54] sm:$0x7]
        %v249 = vld [vmem:[%s206 + $0x58] sm:$0xf]
        %v250 = vld [vmem:[%s206 + $0x5c] sm:$0x7]
        %vm251 = vcmask 392192
        %252 = vst.msk [vmem:[#allocation2] sm:$0xff] %vm251, 0
        %253 = vst.msk [vmem:[#allocation2 + $0x8] sm:$0xff] %vm251, 0
        %254 = vst.msk [vmem:[#allocation2 + $0x10] sm:$0xff] %vm251, 0
        %255 = vst.msk [vmem:[#allocation2 + $0x18] sm:$0xff] %vm251, 0
        %256 = vst.msk [vmem:[#allocation2 + $0x20] sm:$0xff] %vm251, 0
        %257 = vst.msk [vmem:[#allocation2 + $0x28] sm:$0xff] %vm251, 0
        %258 = vst.msk [vmem:[#allocation2 + $0x30] sm:$0xff] %vm251, 0
        %259 = vst.msk [vmem:[#allocation2 + $0x38] sm:$0xff] %vm251, 0
        %260 = vst.msk [vmem:[#allocation2 + $0x40] sm:$0xff] %vm251, 0
        %261 = vst.msk [vmem:[#allocation2 + $0x48] sm:$0xff] %vm251, 0
        %262 = vst.msk [vmem:[#allocation2 + $0x50] sm:$0xff] %vm251, 0
        %263 = vst.msk [vmem:[#allocation2 + $0x58] sm:$0xff] %vm251, 0
        %264 = vst.msk [vmem:[#allocation2 + $0x60] sm:$0xff] %vm251, 0
        %265 = vst.msk [vmem:[#allocation2 + $0x68] sm:$0xff] %vm251, 0
        %v290 = vunpack.c.l.b16 %v227
        %v291 = vunpack.c.l.b16 %v228
        %v292 = vunpack.c.l.b16 %v229
        %v293 = vunpack.c.l.b16 %v230
        %v294 = vunpack.c.l.b16 %v231
        %v295 = vunpack.c.l.b16 %v232
        %v296 = vunpack.c.l.b16 %v233
        %v297 = vunpack.c.l.b16 %v234
        %v298 = vunpack.c.l.b16 %v235
        %v299 = vunpack.c.l.b16 %v236
        %v300 = vunpack.c.l.b16 %v237
        %v301 = vunpack.c.l.b16 %v238
        %v302 = vunpack.c.l.b16 %v239
        %v303 = vunpack.c.l.b16 %v240
        %v304 = vunpack.c.l.b16 %v241
        %v305 = vunpack.c.l.b16 %v242
        %v306 = vunpack.c.l.b16 %v243
        %v307 = vunpack.c.l.b16 %v244
        %v308 = vunpack.c.l.b16 %v245
        %v309 = vunpack.c.l.b16 %v246
        %v310 = vunpack.c.l.b16 %v247
        %v311 = vunpack.c.l.b16 %v248
        %v312 = vunpack.c.l.b16 %v249
        %v313 = vunpack.c.l.b16 %v250
        %v314 = vpack.c.b16 %v291, %v290
        %v315 = vpack.c.b16 %v293, %v292
        %v316 = vpack.c.b16 %v295, %v294
        %v317 = vpack.c.b16 %v297, %v296
        %v318 = vpack.c.b16 %v299, %v298
        %v319 = vpack.c.b16 %v301, %v300
        %v320 = vpack.c.b16 %v303, %v302
        %v321 = vpack.c.b16 %v305, %v304
        %v322 = vpack.c.b16 %v307, %v306
        %v323 = vpack.c.b16 %v309, %v308
        %v324 = vpack.c.b16 %v311, %v310
        %v325 = vpack.c.b16 %v313, %v312
        %v327 = vshrl.u32 %v314, 16
        %v329 = vrot.slane %v327, 7
        %v330 = vshll.u32 %v314, 16
        %v332 = vor.u32 %v329, %v330
        %v334 = vshrl.u32 %v315, 16
        %v336 = vrot.slane %v334, 7
        %v337 = vshll.u32 %v315, 16
        %v339 = vor.u32 %v336, %v337
        %v341 = vshrl.u32 %v316, 16
        %v343 = vrot.slane %v341, 7
        %v344 = vshll.u32 %v316, 16
        %v346 = vor.u32 %v343, %v344
        %v348 = vshrl.u32 %v317, 16
        %v350 = vrot.slane %v348, 7
        %v351 = vshll.u32 %v317, 16
        %v353 = vor.u32 %v350, %v351
        %v355 = vshrl.u32 %v318, 16
        %v357 = vrot.slane %v355, 7
        %v358 = vshll.u32 %v318, 16
        %v360 = vor.u32 %v357, %v358
        %v362 = vshrl.u32 %v319, 16
        %v364 = vrot.slane %v362, 7
        %v365 = vshll.u32 %v319, 16
        %v367 = vor.u32 %v364, %v365
        %v369 = vshrl.u32 %v320, 16
        %v371 = vrot.slane %v369, 7
        %v372 = vshll.u32 %v320, 16
        %v374 = vor.u32 %v371, %v372
        %v376 = vshrl.u32 %v321, 16
        %v378 = vrot.slane %v376, 7
        %v379 = vshll.u32 %v321, 16
        %v381 = vor.u32 %v378, %v379
        %v383 = vshrl.u32 %v322, 16
        %v385 = vrot.slane %v383, 7
        %v386 = vshll.u32 %v322, 16
        %v388 = vor.u32 %v385, %v386
        %v390 = vshrl.u32 %v323, 16
        %v392 = vrot.slane %v390, 7
        %v393 = vshll.u32 %v323, 16
        %v395 = vor.u32 %v392, %v393
        %v397 = vshrl.u32 %v324, 16
        %v399 = vrot.slane %v397, 7
        %v400 = vshll.u32 %v324, 16
        %v402 = vor.u32 %v399, %v400
        %v404 = vshrl.u32 %v325, 16
        %v406 = vrot.slane %v404, 7
        %v407 = vshll.u32 %v325, 16
        %v409 = vor.u32 %v406, %v407
        %s422 = scalar_lea.vmem [#allocation2], 8
        %vm423 = vcmask 129024
        %vm424 = vsmask.f32 7938
        %vm425 = vmand %vm423, %vm424
        %v426 = vld [vmem:[%s422] sm:$0x7f]
        %v427 = vsel %vm425, %v332, %v426
        %428 = vst [vmem:[%s422] sm:$0x7f] %v427
        %v429 = vld [vmem:[%s422 + $0x8] sm:$0x7f]
        %v430 = vsel %vm425, %v339, %v429
        %431 = vst [vmem:[%s422 + $0x8] sm:$0x7f] %v430
        %v432 = vld [vmem:[%s422 + $0x10] sm:$0x7f]
        %v433 = vsel %vm425, %v346, %v432
        %434 = vst [vmem:[%s422 + $0x10] sm:$0x7f] %v433
        %v435 = vld [vmem:[%s422 + $0x18] sm:$0x7f]
        %v436 = vsel %vm425, %v353, %v435
        %437 = vst [vmem:[%s422 + $0x18] sm:$0x7f] %v436
        %v438 = vld [vmem:[%s422 + $0x20] sm:$0x7f]
        %v439 = vsel %vm425, %v360, %v438
        %440 = vst [vmem:[%s422 + $0x20] sm:$0x7f] %v439
        %v441 = vld [vmem:[%s422 + $0x28] sm:$0x7f]
        %v442 = vsel %vm425, %v367, %v441
        %443 = vst [vmem:[%s422 + $0x28] sm:$0x7f] %v442
        %v444 = vld [vmem:[%s422 + $0x30] sm:$0x7f]
        %v445 = vsel %vm425, %v374, %v444
        %446 = vst [vmem:[%s422 + $0x30] sm:$0x7f] %v445
        %v447 = vld [vmem:[%s422 + $0x38] sm:$0x7f]
        %v448 = vsel %vm425, %v381, %v447
        %449 = vst [vmem:[%s422 + $0x38] sm:$0x7f] %v448
        %v450 = vld [vmem:[%s422 + $0x40] sm:$0x7f]
        %v451 = vsel %vm425, %v388, %v450
        %452 = vst [vmem:[%s422 + $0x40] sm:$0x7f] %v451
        %v453 = vld [vmem:[%s422 + $0x48] sm:$0x7f]
        %v454 = vsel %vm425, %v395, %v453
        %455 = vst [vmem:[%s422 + $0x48] sm:$0x7f] %v454
        %v456 = vld [vmem:[%s422 + $0x50] sm:$0x7f]
        %v457 = vsel %vm425, %v402, %v456
        %458 = vst [vmem:[%s422 + $0x50] sm:$0x7f] %v457
        %v459 = vld [vmem:[%s422 + $0x58] sm:$0x7f]
        %v460 = vsel %vm425, %v409, %v459
        %461 = vst [vmem:[%s422 + $0x58] sm:$0x7f] %v460
        %462 = vrot.lane.b32.xlu0 %v314, 16
        %v463 = vpop.permute.xlu0 %462
        %464 = vrot.lane.b32.xlu0 %v315, 16
        %v465 = vpop.permute.xlu0 %464
        %466 = vrot.lane.b32.xlu0 %v316, 16
        %v467 = vpop.permute.xlu0 %466
        %468 = vrot.lane.b32.xlu0 %v317, 16
        %v469 = vpop.permute.xlu0 %468
        %470 = vrot.lane.b32.xlu0 %v318, 16
        %v471 = vpop.permute.xlu0 %470
        %472 = vrot.lane.b32.xlu0 %v319, 16
        %v473 = vpop.permute.xlu0 %472
        %474 = vrot.lane.b32.xlu0 %v320, 16
        %v475 = vpop.permute.xlu0 %474
        %476 = vrot.lane.b32.xlu0 %v321, 16
        %v477 = vpop.permute.xlu0 %476
        %478 = vrot.lane.b32.xlu0 %v322, 16
        %v479 = vpop.permute.xlu0 %478
        %480 = vrot.lane.b32.xlu0 %v323, 16
        %v481 = vpop.permute.xlu0 %480
        %482 = vrot.lane.b32.xlu0 %v324, 16
        %v483 = vpop.permute.xlu0 %482
        %484 = vrot.lane.b32.xlu0 %v325, 16
        %v485 = vpop.permute.xlu0 %484
        %vm498 = vcmask 260224
        %vm499 = vsmask.f32 6400
        %vm500 = vmand %vm498, %vm499
        %v501 = vld [vmem:[%s422] sm:$0x7f]
        %v502 = vsel %vm500, %v463, %v501
        %503 = vst [vmem:[%s422] sm:$0x7f] %v502
        %v504 = vld [vmem:[%s422 + $0x8] sm:$0x7f]
        %v505 = vsel %vm500, %v465, %v504
        %506 = vst [vmem:[%s422 + $0x8] sm:$0x7f] %v505
        %v507 = vld [vmem:[%s422 + $0x10] sm:$0x7f]
        %v508 = vsel %vm500, %v467, %v507
        %509 = vst [vmem:[%s422 + $0x10] sm:$0x7f] %v508
        %v510 = vld [vmem:[%s422 + $0x18] sm:$0x7f]
        %v511 = vsel %vm500, %v469, %v510
        %512 = vst [vmem:[%s422 + $0x18] sm:$0x7f] %v511
        %v513 = vld [vmem:[%s422 + $0x20] sm:$0x7f]
        %v514 = vsel %vm500, %v471, %v513
        %515 = vst [vmem:[%s422 + $0x20] sm:$0x7f] %v514
        %v516 = vld [vmem:[%s422 + $0x28] sm:$0x7f]
        %v517 = vsel %vm500, %v473, %v516
        %518 = vst [vmem:[%s422 + $0x28] sm:$0x7f] %v517
        %v519 = vld [vmem:[%s422 + $0x30] sm:$0x7f]
        %v520 = vsel %vm500, %v475, %v519
        %521 = vst [vmem:[%s422 + $0x30] sm:$0x7f] %v520
        %v522 = vld [vmem:[%s422 + $0x38] sm:$0x7f]
        %v523 = vsel %vm500, %v477, %v522
        %524 = vst [vmem:[%s422 + $0x38] sm:$0x7f] %v523
        %v525 = vld [vmem:[%s422 + $0x40] sm:$0x7f]
        %v526 = vsel %vm500, %v479, %v525
        %527 = vst [vmem:[%s422 + $0x40] sm:$0x7f] %v526
        %v528 = vld [vmem:[%s422 + $0x48] sm:$0x7f]
        %v529 = vsel %vm500, %v481, %v528
        %530 = vst [vmem:[%s422 + $0x48] sm:$0x7f] %v529
        %v531 = vld [vmem:[%s422 + $0x50] sm:$0x7f]
        %v532 = vsel %vm500, %v483, %v531
        %533 = vst [vmem:[%s422 + $0x50] sm:$0x7f] %v532
        %v534 = vld [vmem:[%s422 + $0x58] sm:$0x7f]
        %v535 = vsel %vm500, %v485, %v534
        %536 = vst [vmem:[%s422 + $0x58] sm:$0x7f] %v535
        %v537 = vrot.slane %v330, 1
        %v538 = vor.u32 %v327, %v537
        %v539 = vrot.slane %v337, 1
        %v540 = vor.u32 %v334, %v539
        %v541 = vrot.slane %v344, 1
        %v542 = vor.u32 %v341, %v541
        %v543 = vrot.slane %v351, 1
        %v544 = vor.u32 %v348, %v543
        %v545 = vrot.slane %v358, 1
        %v546 = vor.u32 %v355, %v545
        %v547 = vrot.slane %v365, 1
        %v548 = vor.u32 %v362, %v547
        %v549 = vrot.slane %v372, 1
        %v550 = vor.u32 %v369, %v549
        %v551 = vrot.slane %v379, 1
        %v552 = vor.u32 %v376, %v551
        %v553 = vrot.slane %v386, 1
        %v554 = vor.u32 %v383, %v553
        %v555 = vrot.slane %v393, 1
        %v556 = vor.u32 %v390, %v555
        %v557 = vrot.slane %v400, 1
        %v558 = vor.u32 %v397, %v557
        %v559 = vrot.slane %v407, 1
        %v560 = vor.u32 %v404, %v559
        %561 = vrot.lane.b32.xlu0 %v538, 32
        %v562 = vpop.permute.xlu0 %561
        %563 = vrot.lane.b32.xlu0 %v540, 32
        %v564 = vpop.permute.xlu0 %563
        %565 = vrot.lane.b32.xlu0 %v542, 32
        %v566 = vpop.permute.xlu0 %565
        %567 = vrot.lane.b32.xlu0 %v544, 32
        %v568 = vpop.permute.xlu0 %567
        %569 = vrot.lane.b32.xlu0 %v546, 32
        %v570 = vpop.permute.xlu0 %569
        %571 = vrot.lane.b32.xlu0 %v548, 32
        %v572 = vpop.permute.xlu0 %571
        %573 = vrot.lane.b32.xlu0 %v550, 32
        %v574 = vpop.permute.xlu0 %573
        %575 = vrot.lane.b32.xlu0 %v552, 32
        %v576 = vpop.permute.xlu0 %575
        %577 = vrot.lane.b32.xlu0 %v554, 32
        %v578 = vpop.permute.xlu0 %577
        %579 = vrot.lane.b32.xlu0 %v556, 32
        %v580 = vpop.permute.xlu0 %579
        %581 = vrot.lane.b32.xlu0 %v558, 32
        %v582 = vpop.permute.xlu0 %581
        %583 = vrot.lane.b32.xlu0 %v560, 32
        %v584 = vpop.permute.xlu0 %583
        %vm597 = vcmask 390400
        %598 = vst.msk [vmem:[%s422] sm:$0x3f] %vm597, %v562
        %599 = vst.msk [vmem:[%s422 + $0x8] sm:$0x3f] %vm597, %v564
        %600 = vst.msk [vmem:[%s422 + $0x10] sm:$0x3f] %vm597, %v566
        %601 = vst.msk [vmem:[%s422 + $0x18] sm:$0x3f] %vm597, %v568
        %602 = vst.msk [vmem:[%s422 + $0x20] sm:$0x3f] %vm597, %v570
        %603 = vst.msk [vmem:[%s422 + $0x28] sm:$0x3f] %vm597, %v572
        %604 = vst.msk [vmem:[%s422 + $0x30] sm:$0x3f] %vm597, %v574
        %605 = vst.msk [vmem:[%s422 + $0x38] sm:$0x3f] %vm597, %v576
        %606 = vst.msk [vmem:[%s422 + $0x40] sm:$0x3f] %vm597, %v578
        %607 = vst.msk [vmem:[%s422 + $0x48] sm:$0x3f] %vm597, %v580
        %608 = vst.msk [vmem:[%s422 + $0x50] sm:$0x3f] %vm597, %v582
        %609 = vst.msk [vmem:[%s422 + $0x58] sm:$0x3f] %vm597, %v584
      $region36: #{tpu_custom_call.1} parent=31 // pred_fallthru
        _
      %v610 = vld [vmem:[#allocation2] sm:$0xff]
      %v611 = vld [vmem:[#allocation2 + $0x8] sm:$0xff]
      %v612 = vld [vmem:[#allocation2 + $0x10] sm:$0xff]
      %v613 = vld [vmem:[#allocation2 + $0x18] sm:$0xff]
      %v614 = vld [vmem:[#allocation2 + $0x20] sm:$0xff]
      %v615 = vld [vmem:[#allocation2 + $0x28] sm:$0xff]
      %v616 = vld [vmem:[#allocation2 + $0x30] sm:$0xff]
      %v617 = vld [vmem:[#allocation2 + $0x38] sm:$0xff]
      %v618 = vld [vmem:[#allocation2 + $0x40] sm:$0xff]
      %v619 = vld [vmem:[#allocation2 + $0x48] sm:$0xff]
      %v620 = vld [vmem:[#allocation2 + $0x50] sm:$0xff]
      %v621 = vld [vmem:[#allocation2 + $0x58] sm:$0xff]
      %v622 = vld [vmem:[%s210] sm:$0xf]
      %v623 = vld [vmem:[%s210 + $0x4] sm:$0xf]
      %v624 = vld [vmem:[%s210 + $0x8] sm:$0xf]
      %v625 = vld [vmem:[%s210 + $0xc] sm:$0xf]
      %v626 = vld [vmem:[%s210 + $0x10] sm:$0xf]
      %v627 = vld [vmem:[%s210 + $0x14] sm:$0xf]
      %s628 = scalar_lea.vmem [#allocation2], 8
      %v629 = vld [vmem:[%s628] sm:$0xff]
      %v630 = vld [vmem:[%s628 + $0x8] sm:$0xff]
      %v631 = vld [vmem:[%s628 + $0x10] sm:$0xff]
      %v632 = vld [vmem:[%s628 + $0x18] sm:$0xff]
      %v633 = vld [vmem:[%s628 + $0x20] sm:$0xff]
      %v634 = vld [vmem:[%s628 + $0x28] sm:$0xff]
      %v635 = vld [vmem:[%s628 + $0x30] sm:$0xff]
      %v636 = vld [vmem:[%s628 + $0x38] sm:$0xff]
      %v637 = vld [vmem:[%s628 + $0x40] sm:$0xff]
      %v638 = vld [vmem:[%s628 + $0x48] sm:$0xff]
      %v639 = vld [vmem:[%s628 + $0x50] sm:$0xff]
      %v640 = vld [vmem:[%s628 + $0x58] sm:$0xff]
      %s641 = scalar_lea.vmem %s210, 24
      %v642 = vld [vmem:[%s641] sm:$0xf]
      %v643 = vld [vmem:[%s641 + $0x4] sm:$0xf]
      %v644 = vld [vmem:[%s641 + $0x8] sm:$0xf]
      %v645 = vld [vmem:[%s641 + $0xc] sm:$0xf]
      %v646 = vld [vmem:[%s641 + $0x10] sm:$0xf]
      %v647 = vld [vmem:[%s641 + $0x14] sm:$0xf]
      %v654 = vunpack.c.l.b16 %v642
      %v655 = vunpack.c.l.b16 %v643
      %v656 = vunpack.c.l.b16 %v644
      %v657 = vunpack.c.l.b16 %v645
      %v658 = vunpack.c.l.b16 %v646
      %v659 = vunpack.c.l.b16 %v647
      %v660 = vpack.c.b16 %v655, %v654
      %v661 = vpack.c.b16 %v657, %v656
      %v662 = vpack.c.b16 %v659, %v658
      %vm666 = vcmask 392192
      %v668 = vsel %vm666, %v629, 0
      %v671 = vsel %vm666, %v630, 0
      %v674 = vsel %vm666, %v631, 0
      %v677 = vsel %vm666, %v632, 0
      %v680 = vsel %vm666, %v633, 0
      %v683 = vsel %vm666, %v634, 0
      %v686 = vsel %vm666, %v635, 0
      %v689 = vsel %vm666, %v636, 0
      %v692 = vsel %vm666, %v637, 0
      %v695 = vsel %vm666, %v638, 0
      %v698 = vsel %vm666, %v639, 0
      %v701 = vsel %vm666, %v640, 0
      %703 = vmatprep.subr.bf16.mxu0 0
      %704 = vmatpush1.bf16.msra.mxu0 %v660
      %705 = vmatprep.subr.bf16.mxu0 0
      %706 = vmatpush1.bf16.msra.mxu0 %v661
      %707 = vmatprep.subr.bf16.mxu0 0
      %708 = vmatpush1.bf16.msra.mxu0 %v662
      %709 = vmatprep.subr.bf16.mxu0 0
      %710 = vmatpush1.bf16.msra.mxu0 0
      %711 = vmatprep.subr.bf16.mxu0 0
      %712 = vmatpush1.bf16.msra.mxu0 0
      %713 = vmatprep.subr.bf16.mxu0 0
      %714 = vmatpush1.bf16.msra.mxu0 0
      %715 = vmatprep.subr.bf16.mxu0 0
      %716 = vmatpush1.bf16.msra.mxu0 0
      %717 = vmatprep.subr.bf16.mxu0 0
      %718 = vmatpush1.bf16.msra.mxu0 0
      %719 = vmatprep.subr.bf16.mxu0 0
      %720 = vmatpush1.bf16.msra.mxu0 0
      %721 = vmatprep.subr.bf16.mxu0 0
      %722 = vmatpush1.bf16.msra.mxu0 0
      %723 = vmatprep.subr.bf16.mxu0 0
      %724 = vmatpush1.bf16.msra.mxu0 0
      %725 = vmatprep.subr.bf16.mxu0 0
      %726 = vmatpush1.bf16.msra.mxu0 0
      %727 = vmatprep.subr.bf16.mxu0 0
      %728 = vmatpush1.bf16.msra.mxu0 0
      %729 = vmatprep.subr.bf16.mxu0 0
      %730 = vmatpush1.bf16.msra.mxu0 0
      %731 = vmatprep.subr.bf16.mxu0 0
      %732 = vmatpush1.bf16.msra.mxu0 0
      %733 = vmatprep.subr.bf16.mxu0 0
      %734 = vmatpush1.bf16.msra.mxu0 0
      %735 = vmatprep.mubr.bf16.mxu0 0
      %736 = vmatmul.mubr.bf16.gmra.mrb[0].mxu0 %v668
      %v737 = vpop.f32.mrb[0].mxu0
      %v738 = vadd.f32 0.0, %v737
      %v739 = vpop.f32.mrb[0].mxu0
      %v740 = vpop.f32.mrb[0].mxu0
      %v741 = vadd.f32 0.0, %v740
      %v742 = vpop.f32.mrb[0].mxu0
      %743 = vmatprep.mubr.bf16.mxu0 0
      %744 = vmatmul.mubr.bf16.gmra.mrb[0].mxu0 %v671
      %v745 = vpop.f32.mrb[0].mxu0
      %v746 = vadd.f32 0.0, %v745
      %v747 = vpop.f32.mrb[0].mxu0
      %v748 = vpop.f32.mrb[0].mxu0
      %v749 = vadd.f32 0.0, %v748
      %v750 = vpop.f32.mrb[0].mxu0
      %751 = vmatprep.mubr.bf16.mxu0 0
      %752 = vmatmul.mubr.bf16.gmra.mrb[0].mxu0 %v674
      %v753 = vpop.f32.mrb[0].mxu0
      %v754 = vadd.f32 0.0, %v753
      %v755 = vpop.f32.mrb[0].mxu0
      %v756 = vpop.f32.mrb[0].mxu0
      %v757 = vadd.f32 0.0, %v756
      %v758 = vpop.f32.mrb[0].mxu0
      %759 = vmatprep.mubr.bf16.mxu0 0
      %760 = vmatmul.mubr.bf16.gmra.mrb[0].mxu0 %v677
      %v761 = vpop.f32.mrb[0].mxu0
      %v762 = vadd.f32 0.0, %v761
      %v763 = vpop.f32.mrb[0].mxu0
      %v764 = vpop.f32.mrb[0].mxu0
      %v765 = vadd.f32 0.0, %v764
      %v766 = vpop.f32.mrb[0].mxu0
      %767 = vmatprep.mubr.bf16.mxu0 0
      %768 = vmatmul.mubr.bf16.gmra.mrb[0].mxu0 %v680
      %v769 = vpop.f32.mrb[0].mxu0
      %v770 = vadd.f32 0.0, %v769
      %v771 = vpop.f32.mrb[0].mxu0
      %v772 = vpop.f32.mrb[0].mxu0
      %v773 = vadd.f32 0.0, %v772
      %v774 = vpop.f32.mrb[0].mxu0
      %775 = vmatprep.mubr.bf16.mxu0 0
      %776 = vmatmul.mubr.bf16.gmra.mrb[0].mxu0 %v683
      %v777 = vpop.f32.mrb[0].mxu0
      %v778 = vadd.f32 0.0, %v777
      %v779 = vpop.f32.mrb[0].mxu0
      %v780 = vpop.f32.mrb[0].mxu0
      %v781 = vadd.f32 0.0, %v780
      %v782 = vpop.f32.mrb[0].mxu0
      %783 = vmatprep.mubr.bf16.mxu0 0
      %784 = vmatmul.mubr.bf16.gmra.mrb[0].mxu0 %v686
      %v785 = vpop.f32.mrb[0].mxu0
      %v786 = vadd.f32 0.0, %v785
      %v787 = vpop.f32.mrb[0].mxu0
      %v788 = vpop.f32.mrb[0].mxu0
      %v789 = vadd.f32 0.0, %v788
      %v790 = vpop.f32.mrb[0].mxu0
      %791 = vmatprep.mubr.bf16.mxu0 0
      %792 = vmatmul.mubr.bf16.gmra.mrb[0].mxu0 %v689
      %v793 = vpop.f32.mrb[0].mxu0
      %v794 = vadd.f32 0.0, %v793
      %v795 = vpop.f32.mrb[0].mxu0
      %v796 = vpop.f32.mrb[0].mxu0
      %v797 = vadd.f32 0.0, %v796
      %v798 = vpop.f32.mrb[0].mxu0
      %799 = vmatprep.mubr.bf16.mxu0 0
      %800 = vmatmul.mubr.bf16.gmra.mrb[0].mxu0 %v692
      %v801 = vpop.f32.mrb[0].mxu0
      %v802 = vadd.f32 0.0, %v801
      %v803 = vpop.f32.mrb[0].mxu0
      %v804 = vpop.f32.mrb[0].mxu0
      %v805 = vadd.f32 0.0, %v804
      %v806 = vpop.f32.mrb[0].mxu0
      %807 = vmatprep.mubr.bf16.mxu0 0
      %808 = vmatmul.mubr.bf16.gmra.mrb[0].mxu0 %v695
      %v809 = vpop.f32.mrb[0].mxu0
      %v810 = vadd.f32 0.0, %v809
      %v811 = vpop.f32.mrb[0].mxu0
      %v812 = vpop.f32.mrb[0].mxu0
      %v813 = vadd.f32 0.0, %v812
      %v814 = vpop.f32.mrb[0].mxu0
      %815 = vmatprep.mubr.bf16.mxu0 0
      %816 = vmatmul.mubr.bf16.gmra.mrb[0].mxu0 %v698
      %v817 = vpop.f32.mrb[0].mxu0
      %v818 = vadd.f32 0.0, %v817
      %v819 = vpop.f32.mrb[0].mxu0
      %v820 = vpop.f32.mrb[0].mxu0
      %v821 = vadd.f32 0.0, %v820
      %v822 = vpop.f32.mrb[0].mxu0
      %823 = vmatprep.mubr.bf16.mxu0 0
      %824 = vmatmul.mubr.bf16.gmra.mrb[0].mxu0 %v701
      %v825 = vpop.f32.mrb[0].mxu0
      %v826 = vadd.f32 0.0, %v825
      %v827 = vpop.f32.mrb[0].mxu0
      %v828 = vpop.f32.mrb[0].mxu0
      %v829 = vadd.f32 0.0, %v828
      %v830 = vpop.f32.mrb[0].mxu0
      %831 = vdwg.mxu0
      %v838 = vunpack.c.l.b16 %v622
      %v839 = vunpack.c.l.b16 %v623
      %v840 = vunpack.c.l.b16 %v624
      %v841 = vunpack.c.l.b16 %v625
      %v842 = vunpack.c.l.b16 %v626
      %v843 = vunpack.c.l.b16 %v627
      %v844 = vpack.c.b16 %v839, %v838
      %v845 = vpack.c.b16 %v841, %v840
      %v846 = vpack.c.b16 %v843, %v842
      %v851 = vsel %vm666, %v610, 0
      %v854 = vsel %vm666, %v611, 0
      %v857 = vsel %vm666, %v612, 0
      %v860 = vsel %vm666, %v613, 0
      %v863 = vsel %vm666, %v614, 0
      %v866 = vsel %vm666, %v615, 0
      %v869 = vsel %vm666, %v616, 0
      %v872 = vsel %vm666, %v617, 0
      %v875 = vsel %vm666, %v618, 0
      %v878 = vsel %vm666, %v619, 0
      %v881 = vsel %vm666, %v620, 0
      %v884 = vsel %vm666, %v621, 0
      %886 = vmatprep.subr.bf16.mxu0 0
      %887 = vmatpush1.bf16.msra.mxu0 %v844
      %888 = vmatprep.subr.bf16.mxu0 0
      %889 = vmatpush1.bf16.msra.mxu0 %v845
      %890 = vmatprep.subr.bf16.mxu0 0
      %891 = vmatpush1.bf16.msra.mxu0 %v846
      %892 = vmatprep.subr.bf16.mxu0 0
      %893 = vmatpush1.bf16.msra.mxu0 0
      %894 = vmatprep.subr.bf16.mxu0 0
      %895 = vmatpush1.bf16.msra.mxu0 0
      %896 = vmatprep.subr.bf16.mxu0 0
      %897 = vmatpush1.bf16.msra.mxu0 0
      %898 = vmatprep.subr.bf16.mxu0 0
      %899 = vmatpush1.bf16.msra.mxu0 0
      %900 = vmatprep.subr.bf16.mxu0 0
      %901 = vmatpush1.bf16.msra.mxu0 0
      %902 = vmatprep.subr.bf16.mxu0 0
      %903 = vmatpush1.bf16.msra.mxu0 0
      %904 = vmatprep.subr.bf16.mxu0 0
      %905 = vmatpush1.bf16.msra.mxu0 0
      %906 = vmatprep.subr.bf16.mxu0 0
      %907 = vmatpush1.bf16.msra.mxu0 0
      %908 = vmatprep.subr.bf16.mxu0 0
      %909 = vmatpush1.bf16.msra.mxu0 0
      %910 = vmatprep.subr.bf16.mxu0 0
      %911 = vmatpush1.bf16.msra.mxu0 0
      %912 = vmatprep.subr.bf16.mxu0 0
      %913 = vmatpush1.bf16.msra.mxu0 0
      %914 = vmatprep.subr.bf16.mxu0 0
      %915 = vmatpush1.bf16.msra.mxu0 0
      %916 = vmatprep.subr.bf16.mxu0 0
      %917 = vmatpush1.bf16.msra.mxu0 0
      %918 = vmatprep.mubr.bf16.mxu0 0
      %919 = vmatmul.mubr.bf16.gmra.mrb[0].mxu0 %v851
      %v920 = vpop.f32.mrb[0].mxu0
      %v921 = vadd.f32 %v738, %v920
      %v922 = vpop.f32.mrb[0].mxu0
      %v923 = vpop.f32.mrb[0].mxu0
      %v924 = vadd.f32 %v741, %v923
      %v925 = vpop.f32.mrb[0].mxu0
      %926 = vmatprep.mubr.bf16.mxu0 0
      %927 = vmatmul.mubr.bf16.gmra.mrb[0].mxu0 %v854
      %v928 = vpop.f32.mrb[0].mxu0
      %v929 = vadd.f32 %v746, %v928
      %v930 = vpop.f32.mrb[0].mxu0
      %v931 = vpop.f32.mrb[0].mxu0
      %v932 = vadd.f32 %v749, %v931
      %v933 = vpop.f32.mrb[0].mxu0
      %934 = vmatprep.mubr.bf16.mxu0 0
      %935 = vmatmul.mubr.bf16.gmra.mrb[0].mxu0 %v857
      %v936 = vpop.f32.mrb[0].mxu0
      %v937 = vadd.f32 %v754, %v936
      %v938 = vpop.f32.mrb[0].mxu0
      %v939 = vpop.f32.mrb[0].mxu0
      %v940 = vadd.f32 %v757, %v939
      %v941 = vpop.f32.mrb[0].mxu0
      %942 = vmatprep.mubr.bf16.mxu0 0
      %943 = vmatmul.mubr.bf16.gmra.mrb[0].mxu0 %v860
      %v944 = vpop.f32.mrb[0].mxu0
      %v945 = vadd.f32 %v762, %v944
      %v946 = vpop.f32.mrb[0].mxu0
      %v947 = vpop.f32.mrb[0].mxu0
      %v948 = vadd.f32 %v765, %v947
      %v949 = vpop.f32.mrb[0].mxu0
      %950 = vmatprep.mubr.bf16.mxu0 0
      %951 = vmatmul.mubr.bf16.gmra.mrb[0].mxu0 %v863
      %v952 = vpop.f32.mrb[0].mxu0
      %v953 = vadd.f32 %v770, %v952
      %v954 = vpop.f32.mrb[0].mxu0
      %v955 = vpop.f32.mrb[0].mxu0
      %v956 = vadd.f32 %v773, %v955
      %v957 = vpop.f32.mrb[0].mxu0
      %958 = vmatprep.mubr.bf16.mxu0 0
      %959 = vmatmul.mubr.bf16.gmra.mrb[0].mxu0 %v866
      %v960 = vpop.f32.mrb[0].mxu0
      %v961 = vadd.f32 %v778, %v960
      %v962 = vpop.f32.mrb[0].mxu0
      %v963 = vpop.f32.mrb[0].mxu0
      %v964 = vadd.f32 %v781, %v963
      %v965 = vpop.f32.mrb[0].mxu0
      %966 = vmatprep.mubr.bf16.mxu0 0
      %967 = vmatmul.mubr.bf16.gmra.mrb[0].mxu0 %v869
      %v968 = vpop.f32.mrb[0].mxu0
      %v969 = vadd.f32 %v786, %v968
      %v970 = vpop.f32.mrb[0].mxu0
      %v971 = vpop.f32.mrb[0].mxu0
      %v972 = vadd.f32 %v789, %v971
      %v973 = vpop.f32.mrb[0].mxu0
      %974 = vmatprep.mubr.bf16.mxu0 0
      %975 = vmatmul.mubr.bf16.gmra.mrb[0].mxu0 %v872
      %v976 = vpop.f32.mrb[0].mxu0
      %v977 = vadd.f32 %v794, %v976
      %v978 = vpop.f32.mrb[0].mxu0
      %v979 = vpop.f32.mrb[0].mxu0
      %v980 = vadd.f32 %v797, %v979
      %v981 = vpop.f32.mrb[0].mxu0
      %982 = vmatprep.mubr.bf16.mxu0 0
      %983 = vmatmul.mubr.bf16.gmra.mrb[0].mxu0 %v875
      %v984 = vpop.f32.mrb[0].mxu0
      %v985 = vadd.f32 %v802, %v984
      %v986 = vpop.f32.mrb[0].mxu0
      %v987 = vpop.f32.mrb[0].mxu0
      %v988 = vadd.f32 %v805, %v987
      %v989 = vpop.f32.mrb[0].mxu0
      %990 = vmatprep.mubr.bf16.mxu0 0
      %991 = vmatmul.mubr.bf16.gmra.mrb[0].mxu0 %v878
      %v992 = vpop.f32.mrb[0].mxu0
      %v993 = vadd.f32 %v810, %v992
      %v994 = vpop.f32.mrb[0].mxu0
      %v995 = vpop.f32.mrb[0].mxu0
      %v996 = vadd.f32 %v813, %v995
      %v997 = vpop.f32.mrb[0].mxu0
      %998 = vmatprep.mubr.bf16.mxu0 0
      %999 = vmatmul.mubr.bf16.gmra.mrb[0].mxu0 %v881
      %v1000 = vpop.f32.mrb[0].mxu0
      %v1001 = vadd.f32 %v818, %v1000
      %v1002 = vpop.f32.mrb[0].mxu0
      %v1003 = vpop.f32.mrb[0].mxu0
      %v1004 = vadd.f32 %v821, %v1003
      %v1005 = vpop.f32.mrb[0].mxu0
      %1006 = vmatprep.mubr.bf16.mxu0 0
      %1007 = vmatmul.mubr.bf16.gmra.mrb[0].mxu0 %v884
      %v1008 = vpop.f32.mrb[0].mxu0
      %v1009 = vadd.f32 %v826, %v1008
      %v1010 = vpop.f32.mrb[0].mxu0
      %v1011 = vpop.f32.mrb[0].mxu0
      %v1012 = vadd.f32 %v829, %v1011
      %v1013 = vpop.f32.mrb[0].mxu0
      %1014 = vdwg.mxu0
      %s1015 = scalar_lea.vmem [#allocation2], 16
      %v1016 = vld [vmem:[%s1015] sm:$0xff]
      %v1017 = vld [vmem:[%s1015 + $0x8] sm:$0xff]
      %v1018 = vld [vmem:[%s1015 + $0x10] sm:$0xff]
      %v1019 = vld [vmem:[%s1015 + $0x18] sm:$0xff]
      %v1020 = vld [vmem:[%s1015 + $0x20] sm:$0xff]
      %v1021 = vld [vmem:[%s1015 + $0x28] sm:$0xff]
      %v1022 = vld [vmem:[%s1015 + $0x30] sm:$0xff]
      %v1023 = vld [vmem:[%s1015 + $0x38] sm:$0xff]
      %v1024 = vld [vmem:[%s1015 + $0x40] sm:$0xff]
      %v1025 = vld [vmem:[%s1015 + $0x48] sm:$0xff]
      %v1026 = vld [vmem:[%s1015 + $0x50] sm:$0xff]
      %v1027 = vld [vmem:[%s1015 + $0x58] sm:$0xff]
      %s1028 = scalar_lea.vmem %s210, 48
      %v1029 = vld [vmem:[%s1028] sm:$0xf]
      %v1030 = vld [vmem:[%s1028 + $0x4] sm:$0xf]
      %v1031 = vld [vmem:[%s1028 + $0x8] sm:$0xf]
      %v1032 = vld [vmem:[%s1028 + $0xc] sm:$0xf]
      %v1033 = vld [vmem:[%s1028 + $0x10] sm:$0xf]
      %v1034 = vld [vmem:[%s1028 + $0x14] sm:$0xf]
      %v1041 = vunpack.c.l.b16 %v1029
      %v1042 = vunpack.c.l.b16 %v1030
      %v1043 = vunpack.c.l.b16 %v1031
      %v1044 = vunpack.c.l.b16 %v1032
      %v1045 = vunpack.c.l.b16 %v1033
      %v1046 = vunpack.c.l.b16 %v1034
      %v1047 = vpack.c.b16 %v1042, %v1041
      %v1048 = vpack.c.b16 %v1044, %v1043
      %v1049 = vpack.c.b16 %v1046, %v1045
      %v1054 = vsel %vm666, %v1016, 0
      %v1057 = vsel %vm666, %v1017, 0
      %v1060 = vsel %vm666, %v1018, 0
      %v1063 = vsel %vm666, %v1019, 0
      %v1066 = vsel %vm666, %v1020, 0
      %v1069 = vsel %vm666, %v1021, 0
      %v1072 = vsel %vm666, %v1022, 0
      %v1075 = vsel %vm666, %v1023, 0
      %v1078 = vsel %vm666, %v1024, 0
      %v1081 = vsel %vm666, %v1025, 0
      %v1084 = vsel %vm666, %v1026, 0
      %v1087 = vsel %vm666, %v1027, 0
      %1089 = vmatprep.subr.bf16.mxu0 0
      %1090 = vmatpush1.bf16.msra.mxu0 %v1047
      %1091 = vmatprep.subr.bf16.mxu0 0
      %1092 = vmatpush1.bf16.msra.mxu0 %v1048
      %1093 = vmatprep.subr.bf16.mxu0 0
      %1094 = vmatpush1.bf16.msra.mxu0 %v1049
      %1095 = vmatprep.subr.bf16.mxu0 0
      %1096 = vmatpush1.bf16.msra.mxu0 0
      %1097 = vmatprep.subr.bf16.mxu0 0
      %1098 = vmatpush1.bf16.msra.mxu0 0
      %1099 = vmatprep.subr.bf16.mxu0 0
      %1100 = vmatpush1.bf16.msra.mxu0 0
      %1101 = vmatprep.subr.bf16.mxu0 0
      %1102 = vmatpush1.bf16.msra.mxu0 0
      %1103 = vmatprep.subr.bf16.mxu0 0
      %1104 = vmatpush1.bf16.msra.mxu0 0
      %1105 = vmatprep.subr.bf16.mxu0 0
      %1106 = vmatpush1.bf16.msra.mxu0 0
      %1107 = vmatprep.subr.bf16.mxu0 0
      %1108 = vmatpush1.bf16.msra.mxu0 0
      %1109 = vmatprep.subr.bf16.mxu0 0
      %1110 = vmatpush1.bf16.msra.mxu0 0
      %1111 = vmatprep.subr.bf16.mxu0 0
      %1112 = vmatpush1.bf16.msra.mxu0 0
      %1113 = vmatprep.subr.bf16.mxu0 0
      %1114 = vmatpush1.bf16.msra.mxu0 0
      %1115 = vmatprep.subr.bf16.mxu0 0
      %1116 = vmatpush1.bf16.msra.mxu0 0
      %1117 = vmatprep.subr.bf16.mxu0 0
      %1118 = vmatpush1.bf16.msra.mxu0 0
      %1119 = vmatprep.subr.bf16.mxu0 0
      %1120 = vmatpush1.bf16.msra.mxu0 0
      %1121 = vmatprep.mubr.bf16.mxu0 0
      %1122 = vmatmul.mubr.bf16.gmra.mrb[0].mxu0 %v1054
      %v1123 = vpop.f32.mrb[0].mxu0
      %v1124 = vadd.f32 0.0, %v1123
      %v1125 = vpop.f32.mrb[0].mxu0
      %v1126 = vpop.f32.mrb[0].mxu0
      %v1127 = vadd.f32 0.0, %v1126
      %v1128 = vpop.f32.mrb[0].mxu0
      %1129 = vmatprep.mubr.bf16.mxu0 0
      %1130 = vmatmul.mubr.bf16.gmra.mrb[0].mxu0 %v1057
      %v1131 = vpop.f32.mrb[0].mxu0
      %v1132 = vadd.f32 0.0, %v1131
      %v1133 = vpop.f32.mrb[0].mxu0
      %v1134 = vpop.f32.mrb[0].mxu0
      %v1135 = vadd.f32 0.0, %v1134
      %v1136 = vpop.f32.mrb[0].mxu0
      %1137 = vmatprep.mubr.bf16.mxu0 0
      %1138 = vmatmul.mubr.bf16.gmra.mrb[0].mxu0 %v1060
      %v1139 = vpop.f32.mrb[0].mxu0
      %v1140 = vadd.f32 0.0, %v1139
      %v1141 = vpop.f32.mrb[0].mxu0
      %v1142 = vpop.f32.mrb[0].mxu0
      %v1143 = vadd.f32 0.0, %v1142
      %v1144 = vpop.f32.mrb[0].mxu0
      %1145 = vmatprep.mubr.bf16.mxu0 0
      %1146 = vmatmul.mubr.bf16.gmra.mrb[0].mxu0 %v1063
      %v1147 = vpop.f32.mrb[0].mxu0
      %v1148 = vadd.f32 0.0, %v1147
      %v1149 = vpop.f32.mrb[0].mxu0
      %v1150 = vpop.f32.mrb[0].mxu0
      %v1151 = vadd.f32 0.0, %v1150
      %v1152 = vpop.f32.mrb[0].mxu0
      %1153 = vmatprep.mubr.bf16.mxu0 0
      %1154 = vmatmul.mubr.bf16.gmra.mrb[0].mxu0 %v1066
      %v1155 = vpop.f32.mrb[0].mxu0
      %v1156 = vadd.f32 0.0, %v1155
      %v1157 = vpop.f32.mrb[0].mxu0
      %v1158 = vpop.f32.mrb[0].mxu0
      %v1159 = vadd.f32 0.0, %v1158
      %v1160 = vpop.f32.mrb[0].mxu0
      %1161 = vmatprep.mubr.bf16.mxu0 0
      %1162 = vmatmul.mubr.bf16.gmra.mrb[0].mxu0 %v1069
      %v1163 = vpop.f32.mrb[0].mxu0
      %v1164 = vadd.f32 0.0, %v1163
      %v1165 = vpop.f32.mrb[0].mxu0
      %v1166 = vpop.f32.mrb[0].mxu0
      %v1167 = vadd.f32 0.0, %v1166
      %v1168 = vpop.f32.mrb[0].mxu0
      %1169 = vmatprep.mubr.bf16.mxu0 0
      %1170 = vmatmul.mubr.bf16.gmra.mrb[0].mxu0 %v1072
      %v1171 = vpop.f32.mrb[0].mxu0
      %v1172 = vadd.f32 0.0, %v1171
      %v1173 = vpop.f32.mrb[0].mxu0
      %v1174 = vpop.f32.mrb[0].mxu0
      %v1175 = vadd.f32 0.0, %v1174
      %v1176 = vpop.f32.mrb[0].mxu0
      %1177 = vmatprep.mubr.bf16.mxu0 0
      %1178 = vmatmul.mubr.bf16.gmra.mrb[0].mxu0 %v1075
      %v1179 = vpop.f32.mrb[0].mxu0
      %v1180 = vadd.f32 0.0, %v1179
      %v1181 = vpop.f32.mrb[0].mxu0
      %v1182 = vpop.f32.mrb[0].mxu0
      %v1183 = vadd.f32 0.0, %v1182
      %v1184 = vpop.f32.mrb[0].mxu0
      %1185 = vmatprep.mubr.bf16.mxu0 0
      %1186 = vmatmul.mubr.bf16.gmra.mrb[0].mxu0 %v1078
      %v1187 = vpop.f32.mrb[0].mxu0
      %v1188 = vadd.f32 0.0, %v1187
      %v1189 = vpop.f32.mrb[0].mxu0
      %v1190 = vpop.f32.mrb[0].mxu0
      %v1191 = vadd.f32 0.0, %v1190
      %v1192 = vpop.f32.mrb[0].mxu0
      %1193 = vmatprep.mubr.bf16.mxu0 0
      %1194 = vmatmul.mubr.bf16.gmra.mrb[0].mxu0 %v1081
      %v1195 = vpop.f32.mrb[0].mxu0
      %v1196 = vadd.f32 0.0, %v1195
      %v1197 = vpop.f32.mrb[0].mxu0
      %v1198 = vpop.f32.mrb[0].mxu0
      %v1199 = vadd.f32 0.0, %v1198
      %v1200 = vpop.f32.mrb[0].mxu0
      %1201 = vmatprep.mubr.bf16.mxu0 0
      %1202 = vmatmul.mubr.bf16.gmra.mrb[0].mxu0 %v1084
      %v1203 = vpop.f32.mrb[0].mxu0
      %v1204 = vadd.f32 0.0, %v1203
      %v1205 = vpop.f32.mrb[0].mxu0
      %v1206 = vpop.f32.mrb[0].mxu0
      %v1207 = vadd.f32 0.0, %v1206
      %v1208 = vpop.f32.mrb[0].mxu0
      %1209 = vmatprep.mubr.bf16.mxu0 0
      %1210 = vmatmul.mubr.bf16.gmra.mrb[0].mxu0 %v1087
      %v1211 = vpop.f32.mrb[0].mxu0
      %v1212 = vadd.f32 0.0, %v1211
      %v1213 = vpop.f32.mrb[0].mxu0
      %v1214 = vpop.f32.mrb[0].mxu0
      %v1215 = vadd.f32 0.0, %v1214
      %v1216 = vpop.f32.mrb[0].mxu0
      %1217 = vdwg.mxu0
      %v1218 = vadd.f32 %v921, %v1124
      %v1219 = vadd.f32 %v924, %v1127
      %v1220 = vadd.f32 %v929, %v1132
      %v1221 = vadd.f32 %v932, %v1135
      %v1222 = vadd.f32 %v937, %v1140
      %v1223 = vadd.f32 %v940, %v1143
      %v1224 = vadd.f32 %v945, %v1148
      %v1225 = vadd.f32 %v948, %v1151
      %v1226 = vadd.f32 %v953, %v1156
      %v1227 = vadd.f32 %v956, %v1159
      %v1228 = vadd.f32 %v961, %v1164
      %v1229 = vadd.f32 %v964, %v1167
      %v1230 = vadd.f32 %v969, %v1172
      %v1231 = vadd.f32 %v972, %v1175
      %v1232 = vadd.f32 %v977, %v1180
      %v1233 = vadd.f32 %v980, %v1183
      %v1234 = vadd.f32 %v985, %v1188
      %v1235 = vadd.f32 %v988, %v1191
      %v1236 = vadd.f32 %v993, %v1196
      %v1237 = vadd.f32 %v996, %v1199
      %v1238 = vadd.f32 %v1001, %v1204
      %v1239 = vadd.f32 %v1004, %v1207
      %v1240 = vadd.f32 %v1009, %v1212
      %v1241 = vadd.f32 %v1012, %v1215
      %v1242 = vld [vmem:[%s213] sm:$0x1]
      %v1244 = vlaneseq
      %v1245 = vshrl.u32 %v1244, 7
      %v1246 = vsub.s32 0, %v1245
      %v1247 = vrot.slane %v1242, %v1246
      %v1249 = vadd.f32 %v1218, %v1247
      %v1250 = vadd.f32 %v1219, %v1247
      %v1251 = vadd.f32 %v1220, %v1247
      %v1252 = vadd.f32 %v1221, %v1247
      %v1253 = vadd.f32 %v1222, %v1247
      %v1254 = vadd.f32 %v1223, %v1247
      %v1255 = vadd.f32 %v1224, %v1247
      %v1256 = vadd.f32 %v1225, %v1247
      %v1257 = vadd.f32 %v1226, %v1247
      %v1258 = vadd.f32 %v1227, %v1247
      %v1259 = vadd.f32 %v1228, %v1247
      %v1260 = vadd.f32 %v1229, %v1247
      %v1261 = vadd.f32 %v1230, %v1247
      %v1262 = vadd.f32 %v1231, %v1247
      %v1263 = vadd.f32 %v1232, %v1247
      %v1264 = vadd.f32 %v1233, %v1247
      %v1265 = vadd.f32 %v1234, %v1247
      %v1266 = vadd.f32 %v1235, %v1247
      %v1267 = vadd.f32 %v1236, %v1247
      %v1268 = vadd.f32 %v1237, %v1247
      %v1269 = vadd.f32 %v1238, %v1247
      %v1270 = vadd.f32 %v1239, %v1247
      %v1271 = vadd.f32 %v1240, %v1247
      %v1272 = vadd.f32 %v1241, %v1247
      %v1273 = vmax.f32 %v1249, 0.0
      %v1274 = vmax.f32 %v1250, 0.0
      %v1275 = vmax.f32 %v1251, 0.0
      %v1276 = vmax.f32 %v1252, 0.0
      %v1277 = vmax.f32 %v1253, 0.0
      %v1278 = vmax.f32 %v1254, 0.0
      %v1279 = vmax.f32 %v1255, 0.0
      %v1280 = vmax.f32 %v1256, 0.0
      %v1281 = vmax.f32 %v1257, 0.0
      %v1282 = vmax.f32 %v1258, 0.0
      %v1283 = vmax.f32 %v1259, 0.0
      %v1284 = vmax.f32 %v1260, 0.0
      %v1285 = vmax.f32 %v1261, 0.0
      %v1286 = vmax.f32 %v1262, 0.0
      %v1287 = vmax.f32 %v1263, 0.0
      %v1288 = vmax.f32 %v1264, 0.0
      %v1289 = vmax.f32 %v1265, 0.0
      %v1290 = vmax.f32 %v1266, 0.0
      %v1291 = vmax.f32 %v1267, 0.0
      %v1292 = vmax.f32 %v1268, 0.0
      %v1293 = vmax.f32 %v1269, 0.0
      %v1294 = vmax.f32 %v1270, 0.0
      %v1295 = vmax.f32 %v1271, 0.0
      %v1296 = vmax.f32 %v1272, 0.0
      %v1297 = vpack.c.bf16 %v1274, %v1273
      %v1298 = vpack.c.bf16 %v1276, %v1275
      %v1299 = vpack.c.bf16 %v1278, %v1277
      %v1300 = vpack.c.bf16 %v1280, %v1279
      %v1301 = vpack.c.bf16 %v1282, %v1281
      %v1302 = vpack.c.bf16 %v1284, %v1283
      %v1303 = vpack.c.bf16 %v1286, %v1285
      %v1304 = vpack.c.bf16 %v1288, %v1287
      %v1305 = vpack.c.bf16 %v1290, %v1289
      %v1306 = vpack.c.bf16 %v1292, %v1291
      %v1307 = vpack.c.bf16 %v1294, %v1293
      %v1308 = vpack.c.bf16 %v1296, %v1295
      %v1321 = vunpack.c.l.b16 %v1297
      %v1322 = vunpack.c.h.b16 %v1297
      %v1323 = vunpack.c.l.b16 %v1298
      %v1324 = vunpack.c.h.b16 %v1298
      %v1325 = vunpack.c.l.b16 %v1299
      %v1326 = vunpack.c.h.b16 %v1299
      %v1327 = vunpack.c.l.b16 %v1300
      %v1328 = vunpack.c.h.b16 %v1300
      %v1329 = vunpack.c.l.b16 %v1301
      %v1330 = vunpack.c.h.b16 %v1301
      %v1331 = vunpack.c.l.b16 %v1302
      %v1332 = vunpack.c.h.b16 %v1302
      %v1333 = vunpack.c.l.b16 %v1303
      %v1334 = vunpack.c.h.b16 %v1303
      %v1335 = vunpack.c.l.b16 %v1304
      %v1336 = vunpack.c.h.b16 %v1304
      %v1337 = vunpack.c.l.b16 %v1305
      %v1338 = vunpack.c.h.b16 %v1305
      %v1339 = vunpack.c.l.b16 %v1306
      %v1340 = vunpack.c.h.b16 %v1306
      %v1341 = vunpack.c.l.b16 %v1307
      %v1342 = vunpack.c.h.b16 %v1307
      %v1343 = vunpack.c.l.b16 %v1308
      %v1344 = vunpack.c.h.b16 %v1308
      %v1345 = vpack.c.b16 %v1321, %v1321
      %v1346 = vpack.c.b16 %v1322, %v1322
      %v1347 = vpack.c.b16 %v1323, %v1323
      %v1348 = vpack.c.b16 %v1324, %v1324
      %v1349 = vpack.c.b16 %v1325, %v1325
      %v1350 = vpack.c.b16 %v1326, %v1326
      %v1351 = vpack.c.b16 %v1327, %v1327
      %v1352 = vpack.c.b16 %v1328, %v1328
      %v1353 = vpack.c.b16 %v1329, %v1329
      %v1354 = vpack.c.b16 %v1330, %v1330
      %v1355 = vpack.c.b16 %v1331, %v1331
      %v1356 = vpack.c.b16 %v1332, %v1332
      %v1357 = vpack.c.b16 %v1333, %v1333
      %v1358 = vpack.c.b16 %v1334, %v1334
      %v1359 = vpack.c.b16 %v1335, %v1335
      %v1360 = vpack.c.b16 %v1336, %v1336
      %v1361 = vpack.c.b16 %v1337, %v1337
      %v1362 = vpack.c.b16 %v1338, %v1338
      %v1363 = vpack.c.b16 %v1339, %v1339
      %v1364 = vpack.c.b16 %v1340, %v1340
      %v1365 = vpack.c.b16 %v1341, %v1341
      %v1366 = vpack.c.b16 %v1342, %v1342
      %v1367 = vpack.c.b16 %v1343, %v1343
      %v1368 = vpack.c.b16 %v1344, %v1344
      %vm1393 = vcmask 257024
      %1394 = vst.msk [vmem:[%s221] sm:$0xf] %vm1393, %v1345
      %vm1395 = vcmask 256000
      %vm1396 = vsmask.f32 2304
      %vm1397 = vmand %vm1395, %vm1396
      %v1398 = vld [vmem:[%s221 + $0x4] sm:$0x7]
      %v1399 = vsel %vm1397, %v1346, %v1398
      %1400 = vst [vmem:[%s221 + $0x4] sm:$0x7] %v1399
      %1401 = vst.msk [vmem:[%s221 + $0x8] sm:$0xf] %vm1393, %v1347
      %v1402 = vld [vmem:[%s221 + $0xc] sm:$0x7]
      %v1403 = vsel %vm1397, %v1348, %v1402
      %1404 = vst [vmem:[%s221 + $0xc] sm:$0x7] %v1403
      %1405 = vst.msk [vmem:[%s221 + $0x10] sm:$0xf] %vm1393, %v1349
      %v1406 = vld [vmem:[%s221 + $0x14] sm:$0x7]
      %v1407 = vsel %vm1397, %v1350, %v1406
      %1408 = vst [vmem:[%s221 + $0x14] sm:$0x7] %v1407
      %1409 = vst.msk [vmem:[%s221 + $0x18] sm:$0xf] %vm1393, %v1351
      %v1410 = vld [vmem:[%s221 + $0x1c] sm:$0x7]
      %v1411 = vsel %vm1397, %v1352, %v1410
      %1412 = vst [vmem:[%s221 + $0x1c] sm:$0x7] %v1411
      %1413 = vst.msk [vmem:[%s221 + $0x20] sm:$0xf] %vm1393, %v1353
      %v1414 = vld [vmem:[%s221 + $0x24] sm:$0x7]
      %v1415 = vsel %vm1397, %v1354, %v1414
      %1416 = vst [vmem:[%s221 + $0x24] sm:$0x7] %v1415
      %1417 = vst.msk [vmem:[%s221 + $0x28] sm:$0xf] %vm1393, %v1355
      %v1418 = vld [vmem:[%s221 + $0x2c] sm:$0x7]
      %v1419 = vsel %vm1397, %v1356, %v1418
      %1420 = vst [vmem:[%s221 + $0x2c] sm:$0x7] %v1419
      %1421 = vst.msk [vmem:[%s221 + $0x30] sm:$0xf] %vm1393, %v1357
      %v1422 = vld [vmem:[%s221 + $0x34] sm:$0x7]
      %v1423 = vsel %vm1397, %v1358, %v1422
      %1424 = vst [vmem:[%s221 + $0x34] sm:$0x7] %v1423
      %1425 = vst.msk [vmem:[%s221 + $0x38] sm:$0xf] %vm1393, %v1359
      %v1426 = vld [vmem:[%s221 + $0x3c] sm:$0x7]
      %v1427 = vsel %vm1397, %v1360, %v1426
      %1428 = vst [vmem:[%s221 + $0x3c] sm:$0x7] %v1427
      %1429 = vst.msk [vmem:[%s221 + $0x40] sm:$0xf] %vm1393, %v1361
      %v1430 = vld [vmem:[%s221 + $0x44] sm:$0x7]
      %v1431 = vsel %vm1397, %v1362, %v1430
      %1432 = vst [vmem:[%s221 + $0x44] sm:$0x7] %v1431
      %1433 = vst.msk [vmem:[%s221 + $0x48] sm:$0xf] %vm1393, %v1363
      %v1434 = vld [vmem:[%s221 + $0x4c] sm:$0x7]
      %v1435 = vsel %vm1397, %v1364, %v1434
      %1436 = vst [vmem:[%s221 + $0x4c] sm:$0x7] %v1435
      %1437 = vst.msk [vmem:[%s221 + $0x50] sm:$0xf] %vm1393, %v1365
      %v1438 = vld [vmem:[%s221 + $0x54] sm:$0x7]
      %v1439 = vsel %vm1397, %v1366, %v1438
      %1440 = vst [vmem:[%s221 + $0x54] sm:$0x7] %v1439
      %1441 = vst.msk [vmem:[%s221 + $0x58] sm:$0xf] %vm1393, %v1367
      %v1442 = vld [vmem:[%s221 + $0x5c] sm:$0x7]
      %v1443 = vsel %vm1397, %v1368, %v1442
      %1444 = vst [vmem:[%s221 + $0x5c] sm:$0x7] %v1443
      %p1445 = scmp.lt.s32.totalorder %s18, 1
      %s1446 = scalar_select %p1445, %s18, 1
      %p1447 = scmp.lt.s32.totalorder %s19, 0
      %s1448 = scalar_select %p1447, %s19, 0
      %s1449 = smul.addr %s1446, 24
      %s1450 = sadd.s32 %s1448, %s1449
      %s1451 = smul.addr %s1450, 4
      %s1452 = scalar_lea.vmem %s3, %s1451
      // Predicated region
      $region37: #{tpu_custom_call.1} parent=31 // pred_check
        %p1453 = pneg %p124
      $region38: #{tpu_custom_call.1} parent=31 // pred_check_branch
        %1455 = sbr.rel (%p1453) target = $region40
      $region39: #{tpu_custom_call.1} parent=31 // pred_region
        _
      $region40: #{tpu_custom_call.1} parent=31 // pred_fallthru
        _
    $region32: #{tpu_custom_call.1} parent=5 // pred_fallthru
      _
    %p1456 = scmp.le.s32.totalorder 2, %s9
    // Predicated region
    $region41: #{tpu_custom_call.1} parent=5 // pred_check
      %p1457 = pneg %p1456
    $region42: #{tpu_custom_call.1} parent=5 // pred_check_branch
      %1459 = sbr.rel (%p1457) target = $region44
    $region43: #{tpu_custom_call.1} parent=5 // pred_region
      %s1460 = ssub.s32 %s9, 2
      // Predicated region
      $region45: #{tpu_custom_call.1} parent=43 // pred_check
        %p1461 = pneg %p130
      $region46: #{tpu_custom_call.1} parent=43 // pred_check_branch
        %1463 = sbr.rel (%p1461) target = $region48
      $region47: #{tpu_custom_call.1} parent=43 // pred_region
        %p1464 = scmp.lt.s32.totalorder %s20, 1
        %s1465 = scalar_select %p1464, %s20, 1
        %p1466 = scmp.lt.s32.totalorder %s21, 0
        %s1467 = scalar_select %p1466, %s21, 0
        %s1468 = smul.addr %s1465, 24
        %s1469 = sadd.s32 %s1467, %s1468
        %s1470 = smul.addr %s1469, 4
        %s1471 = scalar_lea.vmem %s3, %s1470
      $region48: #{tpu_custom_call.1} parent=43 // pred_fallthru
        _
    $region44: #{tpu_custom_call.1} parent=5 // pred_fallthru
      _
  $region6: #{tpu_custom_call.1} parent=0 // loop_footer
    %s13 = sadd.s32 1, %s9
  $region7: #{tpu_custom_call.1} parent=0 // loop_footer_branch
    %8 = sbr.rel target = $region3
  $region8: #{tpu_custom_call.1} parent=0 // loop_exit
    _

</llo_original>
